<compile_context>
chip_gen: v6e
topology: v6e:2x2x1
jax: 0.10.0
libtpu: 0.0.40
codegen_flags: <defaults>
</compile_context>

<pallas_src>
import functools
import math

import jax
import jax.numpy as jnp
from jax.experimental import pallas as pl
from jax.experimental.pallas import tpu as pltpu

DEFAULT_B = 0.001
DEFAULT_M = 2  # module parity; unused in forward

# Candidate lane-dense widths (multiples of 128), widest first.
_COL_CANDIDATES = (4096, 2048, 1024, 512, 256, 128)
# Below this, a plain XLA elementwise beats a pallas_call launch.
_PALLAS_MIN_BYTES = 256 * 1024


def _free_scaler_kernel(b, scale_ref, out_ref):
    x = scale_ref[...]
    out_ref[...] = (jnp.abs(x + (1.0 - b)) + b).astype(out_ref.dtype)


@functools.lru_cache(maxsize=1)
def _tpu_block_config():
    """(target_block_bytes, vmem_limit_bytes or None), per TPU generation."""
    kind = ""
    try:
        dev = jax.devices()[0]
        if dev.platform == "tpu":
            kind = dev.device_kind.lower()
    except Exception:  # pragma: no cover - defensive
        pass
    if "v7" in kind or "v6" in kind:
        # v6e (~1.4 TB/s) / v7x (~3.2 TB/s per TC): 8 MiB tiles keep the
        # ~0.35 us per-step overhead under ~10%.  4 buffers x 8 MiB = 32 MiB,
        # so raise the scoped-VMEM limit a bit above the default.
        return 8 << 20, 40 << 20
    if "v5" in kind:
        # v5e: 16 MiB scoped-VMEM default -> 3 MiB/buffer is safe & ample.
        return 3 << 20, None
    # Unknown backend (interpret mode, future chips): conservative.
    return 2 << 20, None


def _sublane_multiple(dtype):
    bits = jnp.dtype(dtype).itemsize * 8
    if bits >= 32:
        return 8
    if bits == 16:
        return 16
    return 32  # int8 / fp8


def _choose_layout(total, sub):
    """Pick (cols, rows, tail): lane-dense slab over the largest aligned prefix."""
    # Prefer the widest cols that covers the whole array with no tail.
    for cols in _COL_CANDIDATES:
        if total % (cols * sub) == 0:
            return cols, total // cols, 0
    # Otherwise: widest cols giving a nonzero aligned prefix; tail handled in jnp.
    for cols in _COL_CANDIDATES:
        chunk = cols * sub
        main = (total // chunk) * chunk
        if main > 0:
            return cols, main // cols, total - main
    return 0, 0, total  # everything is tail (only possible for tiny inputs)


def _choose_tile_rows(rows, cols, itemsize, sub, target_bytes):
    """Rows per block: near the byte target, sublane-aligned, prefer a divisor."""
    bytes_per_row = cols * itemsize
    max_rows = (target_bytes // bytes_per_row) // sub * sub
    max_rows = max(sub, min(max_rows, rows))
    # Keep >= 2 grid steps when possible so v7x can shard across both TCs
    # (negligible cost on single-TC chips).
    if rows >= 2 * sub:
        half = max(sub, (rows // 2) // sub * sub)
        max_rows = min(max_rows, half)
    # Prefer a divisor of rows near max_rows (no ragged / masked last block).
    cand = max_rows
    for _ in range(64):
        if cand < sub:
            break
        if rows % cand == 0:
            return cand
        cand -= sub
    return max_rows  # ragged last block is still handled correctly by Pallas


def free_scaler(scale, z=None, *, b=DEFAULT_B):
    """Pallas-TPU FreeScaler.forward(scale, z) = |scale + 1 - b| + b."""
    del z  # unused, exactly like the PyTorch module

    orig_shape = scale.shape
    dtype = scale.dtype
    total = math.prod(orig_shape) if orig_shape else 1
    itemsize = jnp.dtype(dtype).itemsize

    def _eltwise(x):
        return (jnp.abs(x + (1.0 - b)) + b).astype(dtype)

    # Fast path: zero-sized or tiny tensors (the typical FreeScaler scale) —
    # plain XLA elementwise fuses with neighbors and avoids launch overhead.
    if total == 0 or total * itemsize < _PALLAS_MIN_BYTES:
        return _eltwise(scale)

    sub = _sublane_multiple(dtype)
    cols, rows, tail = _choose_layout(total, sub)
    if cols == 0:  # no aligned prefix (shouldn't happen past the fast path)
        return _eltwise(scale)

    main = rows * cols
    flat = jnp.reshape(scale, (total,))
    slab = jnp.reshape(flat[:main] if tail else flat, (rows, cols))

    target_bytes, vmem_limit = _tpu_block_config()
    tile_r = _choose_tile_rows(rows, cols, itemsize, sub, target_bytes)
    grid = (pl.cdiv(rows, tile_r),)

    cp_kwargs = dict(dimension_semantics=("parallel",))
    if vmem_limit is not None:
        cp_kwargs["vmem_limit_bytes"] = vmem_limit

    kernel = functools.partial(_free_scaler_kernel, float(b))

    out_slab = pl.pallas_call(
        kernel,
        out_shape=jax.ShapeDtypeStruct((rows, cols), dtype),
        grid_spec=pltpu.PrefetchScalarGridSpec(
            num_scalar_prefetch=0,
            grid=grid,
            in_specs=[pl.BlockSpec((tile_r, cols), lambda i: (i, 0))],
            out_specs=pl.BlockSpec((tile_r, cols), lambda i: (i, 0)),
        ),
        compiler_params=pltpu.CompilerParams(**cp_kwargs),
        cost_estimate=pl.CostEstimate(
            flops=3 * main,
            transcendentals=0,
            bytes_accessed=2 * main * itemsize),
    )(slab)

    out_flat = jnp.reshape(out_slab, (main,))
    if tail:
        out_flat = jnp.concatenate([out_flat, _eltwise(flat[main:])])
    return jnp.reshape(out_flat, orig_shape)


if __name__ == "__main__":
    key = jax.random.PRNGKey(0)
    k1, k2, k3, k4, k5 = jax.random.split(key, 5)

    def ref_fn(x, b=DEFAULT_B):
        return (jnp.abs(x + 1.0 - b) + b).astype(x.dtype)

    # 1) Small NCHW-style activation matching the module's typical usage
    #    (hits the tiny-input fast path).
    scale = jax.random.normal(k1, (2, 4, 16, 16), dtype=jnp.float32)
    z = jax.random.normal(k2, (2, 4, 16, 16), dtype=jnp.float32)
    out = jax.block_until_ready(free_scaler(scale, z))
    assert out.shape == scale.shape and out.dtype == scale.dtype
    assert jnp.allclose(out, ref_fn(scale), atol=1e-6, rtol=1e-6)

    # 2) Larger f32 tensor: exercises the multi-block pipelined Pallas path.
    scale2 = jax.random.normal(k3, (8, 16, 64, 128), dtype=jnp.float32)
    out2 = jax.block_until_ready(free_scaler(scale2))
    assert jnp.allclose(out2, ref_fn(scale2), atol=1e-6, rtol=1e-6)

    # 3) Non-(8*128)-divisible size: exercises the aligned-prefix + jnp tail path.
    scale3 = jax.random.normal(k4, (3, 513, 515), dtype=jnp.float32)
    out3 = jax.block_until_ready(free_scaler(scale3))
    assert jnp.allclose(out3, ref_fn(scale3), atol=1e-6, rtol=1e-6)

    # 4) bf16 tensor: exercises the dtype-aware (16,128) sublane alignment.
    scale4 = jax.random.normal(k5, (4, 32, 64, 128), dtype=jnp.bfloat16)
    out4 = jax.block_until_ready(free_scaler(scale4))
    assert out4.dtype == jnp.bfloat16
    assert jnp.allclose(out4.astype(jnp.float32),
                        ref_fn(scale4).astype(jnp.float32),
                        atol=1e-2, rtol=1e-2)

    print("KERNEL_OK")
</pallas_src>

<mosaic_0001>
module attributes {stable_mosaic.version = 11 : i64} {
  func.func @_free_scaler_kernel(%arg0: i32, %arg1: memref<128x4096xf32, #tpu.memory_space<vmem>>, %arg2: memref<128x4096xf32, #tpu.memory_space<vmem>>) attributes {dimension_semantics = [#tpu.dimension_semantics<parallel>], iteration_bounds = array<i64: 2>, scalar_prefetch = 0 : i64, scratch_operands = 0 : i64, tpu.core_type = #tpu.core_type<tc>, window_params = [{transform_indices = @transform_0, window_bounds = array<i64: 128, 4096>}, {transform_indices = @transform_1, window_bounds = array<i64: 128, 4096>}]} {
    %c0 = arith.constant 0 : index
    %c0_0 = arith.constant 0 : index
    %0 = vector.load %arg1[%c0, %c0_0] : memref<128x4096xf32, #tpu.memory_space<vmem>>, vector<128x4096xf32>
    %cst = arith.constant 9.990000e-01 : f32
    %1 = vector.broadcast %cst : f32 to vector<128x4096xf32>
    %2 = arith.addf %0, %1 : vector<128x4096xf32>
    %3 = math.absf %2 : vector<128x4096xf32>
    %cst_1 = arith.constant 1.000000e-03 : f32
    %4 = vector.broadcast %cst_1 : f32 to vector<128x4096xf32>
    %5 = arith.addf %3, %4 : vector<128x4096xf32>
    %c0_2 = arith.constant 0 : index
    %c0_3 = arith.constant 0 : index
    %6 = vector.load %arg2[%c0_2, %c0_3] : memref<128x4096xf32, #tpu.memory_space<vmem>>, vector<128x4096xf32>
    tpu.vector_store %arg2[%c0_2, %c0_3], %5 {strides = array<i32>} : memref<128x4096xf32, #tpu.memory_space<vmem>>, vector<128x4096xf32>,
    return
  }
  func.func @transform_0(%arg0: i32) -> (i32, i32) {
    %c0_i32 = arith.constant 0 : i32
    %c0_i32_0 = arith.constant 0 : i32
    return %arg0, %c0_i32 : i32, i32
  }
  func.func @transform_1(%arg0: i32) -> (i32, i32) {
    %c0_i32 = arith.constant 0 : i32
    %c0_i32_0 = arith.constant 0 : i32
    return %arg0, %c0_i32 : i32, i32
  }
}

</mosaic_0001>

<llo_original>
// kernel: tpu_custom_call.1
$region0: #{tpu_custom_call.1}
  #allocation0 [shape = 'u32[]', space=smem, size = 0x4, offset = 0x4, fixed_abs, tag = 'smem constant byte address 0x4 - core index']
  #allocation1 [shape = 'u32[144,128]{1,0:T(1,128)}', space=vmem, size = 0x12000, scoped, tag = 'internal scratch']
  %s0 = inlined_call_operand.hbm [shape: f32[256,4096], index: 0, kind: input, shape index: {}]
  %s1 = inlined_call_operand.hbm [shape: f32[256,4096], index: 1, kind: output, shape index: {}]
  %s2 = sld [smem:[#allocation0]]
  $region41: #{tpu_custom_call.1} parent=0
    _
  %s4 = ssub.s32 1, %s2
  %s5 = scalar_select 0, %s4, %s2
  $region1: #{tpu_custom_call.1} parent=0
    #allocation2 [shape = 'u8[4194304]{0}', space=vmem, size = 0x400000, scoped, tag = 'input window, operand 0']
    #allocation3 [shape = 's32[2]{0}', space=sflag, size = 0x8, scoped, tag = 'scoped memory for tpu_custom_call.1']
    #allocation4 [shape = 's32[2]{0}', space=sflag, size = 0x8, scoped, tag = 'scoped memory for tpu_custom_call.1']
    #allocation5 [shape = 'u8[4194304]{0}', space=vmem, size = 0x400000, scoped, tag = 'output window, operand 0']
    %6 = vsyncpa [#allocation3], 0
    %s7 = scalar_lea.sflag [#allocation3], 1
    %8 = vsyncpa %s7, 0
    %9 = vsyncpa [#allocation4], 0
    %s10 = scalar_lea.sflag [#allocation4], 1
    %11 = vsyncpa %s10, 0
    loop: start=0, step=1, limit=4
    $region2: #{tpu_custom_call.1} parent=1 // loop_pre_header
      _
    $region3: #{tpu_custom_call.1} parent=1 // loop_header
      %s13 = sphi 0, %s17
      %p14 = scmp.ge.s32.totalorder %s13, 4
      %s23 = sphi 0, %s25
      %s26 = sphi 0, %s23
      %s27 = sphi 0, %s26
      %s43 = sphi 0, %s27
      %s49 = sphi 0, %s51
      %s52 = sphi 0, %s49
      %s53 = sphi 0, %s52
      %s69 = sphi 0, %s53
    $region4: #{tpu_custom_call.1} parent=1 // loop_header_branch
      %16 = sbr.rel (%p14) target = $region8
    $region5: #{tpu_custom_call.1} parent=1 // loop_body
      %s18 = ssub.s32 %s13, 1
      %s19 = ssub.s32 %s13, 2
      %s20 = sadd.s32 %s13, 1
      %s21 = ssub.s32 %s13, %s20
      %p22 = scmp.eq.s32.totalorder %s21, 0
      %s24 = sadd.s32 %s23, 1
      %s25 = scalar_select %p22, %s23, %s24
      %p28 = pneg %p22
      %p29 = scmp.eq.s32.totalorder %s13, 1
      %p30 = por %p28, %p29
      %p31 = scmp.ne.s32.totalorder %s23, %s26
      %p32 = scmp.eq.s32.totalorder %s13, 0
      %p33 = por %p31, %p32
      %p34 = scmp.ne.s32.totalorder %s23, %s26
      %p35 = scmp.eq.s32.totalorder %s18, 1
      %p36 = por %p34, %p35
      %p37 = scmp.ne.s32.totalorder %s26, %s27
      %p38 = scmp.eq.s32.totalorder %s18, 0
      %p39 = por %p37, %p38
      %p40 = scmp.ne.s32.totalorder %s26, %s27
      %p41 = scmp.eq.s32.totalorder %s19, 1
      %p42 = por %p40, %p41
      %p44 = scmp.ne.s32.totalorder %s27, %s43
      %p45 = scmp.eq.s32.totalorder %s19, 0
      %p46 = por %p44, %p45
      %s47 = ssub.s32 %s13, %s20
      %p48 = scmp.eq.s32.totalorder %s47, 0
      %s50 = sadd.s32 %s49, 1
      %s51 = scalar_select %p48, %s49, %s50
      %p54 = pneg %p48
      %p55 = scmp.eq.s32.totalorder %s13, 1
      %p56 = por %p54, %p55
      %p57 = scmp.ne.s32.totalorder %s49, %s52
      %p58 = scmp.eq.s32.totalorder %s13, 0
      %p59 = por %p57, %p58
      %p60 = scmp.ne.s32.totalorder %s49, %s52
      %p61 = scmp.eq.s32.totalorder %s18, 1
      %p62 = por %p60, %p61
      %p63 = scmp.ne.s32.totalorder %s52, %s53
      %p64 = scmp.eq.s32.totalorder %s18, 0
      %p65 = por %p63, %p64
      %p66 = scmp.ne.s32.totalorder %s52, %s53
      %p67 = scmp.eq.s32.totalorder %s19, 1
      %p68 = por %p66, %p67
      %p70 = scmp.ne.s32.totalorder %s53, %s69
      %p71 = scmp.eq.s32.totalorder %s19, 0
      %p72 = por %p70, %p71
      %p73 = scmp.le.s32.totalorder 1, %s13
      %p74 = scmp.lt.s32.totalorder %s13, 3
      %p75 = pnand %p73, %p74
      %p76 = pneg %p75
      // Predicated region
      $region9: #{tpu_custom_call.1} parent=5 // pred_check
        _
      $region10: #{tpu_custom_call.1} parent=5 // pred_check_branch
        %78 = sbr.rel (%p75) target = $region12
      $region11: #{tpu_custom_call.1} parent=5 // pred_region
        %s79 = ssub.s32 %s13, 1
      $region12: #{tpu_custom_call.1} parent=5 // pred_fallthru
        _
      %p80 = scmp.lt.s32.totalorder %s13, 2
      // Predicated region
      $region13: #{tpu_custom_call.1} parent=5 // pred_check
        %p81 = pneg %p80
      $region14: #{tpu_custom_call.1} parent=5 // pred_check_branch
        %83 = sbr.rel (%p81) target = $region16
      $region15: #{tpu_custom_call.1} parent=5 // pred_region
        // Predicated region
        $region17: #{tpu_custom_call.1} parent=15 // pred_check
          %p84 = pneg %p33
        $region18: #{tpu_custom_call.1} parent=15 // pred_check_branch
          %86 = sbr.rel (%p84) target = $region20
        $region19: #{tpu_custom_call.1} parent=15 // pred_region
          %s87 = sand.u32 %s23, 1
          %s88 = scalar_lea.sflag [#allocation3], %s87
          %s89 = sand.u32 %s23, 1
          %s90 = smul.addr %s89, 4096
          %s91 = scalar_lea.vmem [#allocation2], %s90
          %s92 = smul.u32 16, %s13
          %s94 = ssub.s32 65536, 65536
          %95 = vsyncadd %s88, %s94
          %s96 = smul.addr %s92, 32
          %s97 = smul.addr %s96, 128
          %s98 = scalar_lea.hbm %s0, %s97
          %s99 = sshll.u32 %s91, 4
          %s100 = int_to_ptr.vmem [resolvable:$true] %s99
          %105 = dma.hbm_to_vmem [thread:$0]  %s98, 65536, %s100, %s88, 4096, 4096, 256
        $region20: #{tpu_custom_call.1} parent=15 // pred_fallthru
          _
      $region16: #{tpu_custom_call.1} parent=5 // pred_fallthru
        _
      %p106 = scmp.le.s32.totalorder 1, %s13
      %p107 = scmp.lt.s32.totalorder %s13, 3
      %p108 = pnand %p106, %p107
      %p109 = pneg %p108
      // Predicated region
      $region21: #{tpu_custom_call.1} parent=5 // pred_check
        _
      $region22: #{tpu_custom_call.1} parent=5 // pred_check_branch
        %111 = sbr.rel (%p108) target = $region24
      $region23: #{tpu_custom_call.1} parent=5 // pred_region
        %s112 = ssub.s32 %s13, 1
        %s113 = sand.u32 %s26, 1
        %s114 = scalar_lea.sflag [#allocation3], %s113
        %s115 = sand.u32 %s26, 1
        %s116 = smul.addr %s115, 4096
        %s117 = scalar_lea.vmem [#allocation2], %s116
        // Predicated region
        $region25: #{tpu_custom_call.1} parent=23 // pred_check
          %p118 = pneg %p39
        $region26: #{tpu_custom_call.1} parent=23 // pred_check_branch
          %120 = sbr.rel (%p118) target = $region28
        $region27: #{tpu_custom_call.1} parent=23 // pred_region
          %121 = dma.done %s114, 65536
        $region28: #{tpu_custom_call.1} parent=23 // pred_fallthru
          _
        %s122 = sand.u32 %s26, 1
        %s123 = scalar_lea.sflag [#allocation3], %s122
        %s124 = sand.u32 %s26, 1
        %s125 = smul.addr %s124, 4096
        %s126 = scalar_lea.vmem [#allocation2], %s125
        %p127 = pneg %p39
        %p128 = pneg %p36
        %p129 = pneg %p65
        %p130 = pneg %p62
        %s131 = sand.u32 %s52, 1
        %s132 = scalar_lea.sflag [#allocation4], %s131
        %s133 = sand.u32 %s52, 1
        %s134 = smul.addr %s133, 4096
        %s135 = scalar_lea.vmem [#allocation5], %s134
        %s136 = smul.u32 16, %s18
        %s137 = smul.u32 16, %s18
        %v138 = vld [vmem:[%s117] sm:$0xff]
        %v139 = vld [vmem:[%s117 + $0x8] sm:$0xff]
        %v140 = vld [vmem:[%s117 + $0x10] sm:$0xff]
        %v141 = vld [vmem:[%s117 + $0x18] sm:$0xff]
        %v142 = vld [vmem:[%s117 + $0x20] sm:$0xff]
        %v143 = vld [vmem:[%s117 + $0x28] sm:$0xff]
        %v144 = vld [vmem:[%s117 + $0x30] sm:$0xff]
        %v145 = vld [vmem:[%s117 + $0x38] sm:$0xff]
        %v146 = vld [vmem:[%s117 + $0x40] sm:$0xff]
        %v147 = vld [vmem:[%s117 + $0x48] sm:$0xff]
        %v148 = vld [vmem:[%s117 + $0x50] sm:$0xff]
        %v149 = vld [vmem:[%s117 + $0x58] sm:$0xff]
        %v150 = vld [vmem:[%s117 + $0x60] sm:$0xff]
        %v151 = vld [vmem:[%s117 + $0x68] sm:$0xff]
        %v152 = vld [vmem:[%s117 + $0x70] sm:$0xff]
        %v153 = vld [vmem:[%s117 + $0x78] sm:$0xff]
        %v154 = vld [vmem:[%s117 + $0x80] sm:$0xff]
        %v155 = vld [vmem:[%s117 + $0x88] sm:$0xff]
        %v156 = vld [vmem:[%s117 + $0x90] sm:$0xff]
        %v157 = vld [vmem:[%s117 + $0x98] sm:$0xff]
        %v158 = vld [vmem:[%s117 + $0xa0] sm:$0xff]
        %v159 = vld [vmem:[%s117 + $0xa8] sm:$0xff]
        %v160 = vld [vmem:[%s117 + $0xb0] sm:$0xff]
        %v161 = vld [vmem:[%s117 + $0xb8] sm:$0xff]
        %v162 = vld [vmem:[%s117 + $0xc0] sm:$0xff]
        %v163 = vld [vmem:[%s117 + $0xc8] sm:$0xff]
        %v164 = vld [vmem:[%s117 + $0xd0] sm:$0xff]
        %v165 = vld [vmem:[%s117 + $0xd8] sm:$0xff]
        %v166 = vld [vmem:[%s117 + $0xe0] sm:$0xff]
        %v167 = vld [vmem:[%s117 + $0xe8] sm:$0xff]
        %v168 = vld [vmem:[%s117 + $0xf0] sm:$0xff]
        %v169 = vld [vmem:[%s117 + $0xf8] sm:$0xff]
        %v170 = vld [vmem:[%s117 + $0x100] sm:$0xff]
        %v171 = vld [vmem:[%s117 + $0x108] sm:$0xff]
        %v172 = vld [vmem:[%s117 + $0x110] sm:$0xff]
        %v173 = vld [vmem:[%s117 + $0x118] sm:$0xff]
        %v174 = vld [vmem:[%s117 + $0x120] sm:$0xff]
        %v175 = vld [vmem:[%s117 + $0x128] sm:$0xff]
        %v176 = vld [vmem:[%s117 + $0x130] sm:$0xff]
        %v177 = vld [vmem:[%s117 + $0x138] sm:$0xff]
        %v178 = vld [vmem:[%s117 + $0x140] sm:$0xff]
        %v179 = vld [vmem:[%s117 + $0x148] sm:$0xff]
        %v180 = vld [vmem:[%s117 + $0x150] sm:$0xff]
        %v181 = vld [vmem:[%s117 + $0x158] sm:$0xff]
        %v182 = vld [vmem:[%s117 + $0x160] sm:$0xff]
        %v183 = vld [vmem:[%s117 + $0x168] sm:$0xff]
        %v184 = vld [vmem:[%s117 + $0x170] sm:$0xff]
        %v185 = vld [vmem:[%s117 + $0x178] sm:$0xff]
        %v186 = vld [vmem:[%s117 + $0x180] sm:$0xff]
        %v187 = vld [vmem:[%s117 + $0x188] sm:$0xff]
        %v188 = vld [vmem:[%s117 + $0x190] sm:$0xff]
        %v189 = vld [vmem:[%s117 + $0x198] sm:$0xff]
        %v190 = vld [vmem:[%s117 + $0x1a0] sm:$0xff]
        %v191 = vld [vmem:[%s117 + $0x1a8] sm:$0xff]
        %v192 = vld [vmem:[%s117 + $0x1b0] sm:$0xff]
        %v193 = vld [vmem:[%s117 + $0x1b8] sm:$0xff]
        %v194 = vld [vmem:[%s117 + $0x1c0] sm:$0xff]
        %v195 = vld [vmem:[%s117 + $0x1c8] sm:$0xff]
        %v196 = vld [vmem:[%s117 + $0x1d0] sm:$0xff]
        %v197 = vld [vmem:[%s117 + $0x1d8] sm:$0xff]
        %v198 = vld [vmem:[%s117 + $0x1e0] sm:$0xff]
        %v199 = vld [vmem:[%s117 + $0x1e8] sm:$0xff]
        %v200 = vld [vmem:[%s117 + $0x1f0] sm:$0xff]
        %v201 = vld [vmem:[%s117 + $0x1f8] sm:$0xff]
        %v202 = vld [vmem:[%s117 + $0x200] sm:$0xff]
        %v203 = vld [vmem:[%s117 + $0x208] sm:$0xff]
        %v204 = vld [vmem:[%s117 + $0x210] sm:$0xff]
        %v205 = vld [vmem:[%s117 + $0x218] sm:$0xff]
        %v206 = vld [vmem:[%s117 + $0x220] sm:$0xff]
        %v207 = vld [vmem:[%s117 + $0x228] sm:$0xff]
        %v208 = vld [vmem:[%s117 + $0x230] sm:$0xff]
        %v209 = vld [vmem:[%s117 + $0x238] sm:$0xff]
        %v210 = vld [vmem:[%s117 + $0x240] sm:$0xff]
        %v211 = vld [vmem:[%s117 + $0x248] sm:$0xff]
        %v212 = vld [vmem:[%s117 + $0x250] sm:$0xff]
        %v213 = vld [vmem:[%s117 + $0x258] sm:$0xff]
        %v214 = vld [vmem:[%s117 + $0x260] sm:$0xff]
        %v215 = vld [vmem:[%s117 + $0x268] sm:$0xff]
        %v216 = vld [vmem:[%s117 + $0x270] sm:$0xff]
        %v217 = vld [vmem:[%s117 + $0x278] sm:$0xff]
        %v218 = vld [vmem:[%s117 + $0x280] sm:$0xff]
        %v219 = vld [vmem:[%s117 + $0x288] sm:$0xff]
        %v220 = vld [vmem:[%s117 + $0x290] sm:$0xff]
        %v221 = vld [vmem:[%s117 + $0x298] sm:$0xff]
        %v222 = vld [vmem:[%s117 + $0x2a0] sm:$0xff]
        %v223 = vld [vmem:[%s117 + $0x2a8] sm:$0xff]
        %v224 = vld [vmem:[%s117 + $0x2b0] sm:$0xff]
        %v225 = vld [vmem:[%s117 + $0x2b8] sm:$0xff]
        %v226 = vld [vmem:[%s117 + $0x2c0] sm:$0xff]
        %v227 = vld [vmem:[%s117 + $0x2c8] sm:$0xff]
        %v228 = vld [vmem:[%s117 + $0x2d0] sm:$0xff]
        %v229 = vld [vmem:[%s117 + $0x2d8] sm:$0xff]
        %v230 = vld [vmem:[%s117 + $0x2e0] sm:$0xff]
        %v231 = vld [vmem:[%s117 + $0x2e8] sm:$0xff]
        %v232 = vld [vmem:[%s117 + $0x2f0] sm:$0xff]
        %v233 = vld [vmem:[%s117 + $0x2f8] sm:$0xff]
        %v234 = vld [vmem:[%s117 + $0x300] sm:$0xff]
        %v235 = vld [vmem:[%s117 + $0x308] sm:$0xff]
        %v236 = vld [vmem:[%s117 + $0x310] sm:$0xff]
        %v237 = vld [vmem:[%s117 + $0x318] sm:$0xff]
        %v238 = vld [vmem:[%s117 + $0x320] sm:$0xff]
        %v239 = vld [vmem:[%s117 + $0x328] sm:$0xff]
        %v240 = vld [vmem:[%s117 + $0x330] sm:$0xff]
        %v241 = vld [vmem:[%s117 + $0x338] sm:$0xff]
        %v242 = vld [vmem:[%s117 + $0x340] sm:$0xff]
        %v243 = vld [vmem:[%s117 + $0x348] sm:$0xff]
        %v244 = vld [vmem:[%s117 + $0x350] sm:$0xff]
        %v245 = vld [vmem:[%s117 + $0x358] sm:$0xff]
        %v246 = vld [vmem:[%s117 + $0x360] sm:$0xff]
        %v247 = vld [vmem:[%s117 + $0x368] sm:$0xff]
        %v248 = vld [vmem:[%s117 + $0x370] sm:$0xff]
        %v249 = vld [vmem:[%s117 + $0x378] sm:$0xff]
        %v250 = vld [vmem:[%s117 + $0x380] sm:$0xff]
        %v251 = vld [vmem:[%s117 + $0x388] sm:$0xff]
        %v252 = vld [vmem:[%s117 + $0x390] sm:$0xff]
        %v253 = vld [vmem:[%s117 + $0x398] sm:$0xff]
        %v254 = vld [vmem:[%s117 + $0x3a0] sm:$0xff]
        %v255 = vld [vmem:[%s117 + $0x3a8] sm:$0xff]
        %v256 = vld [vmem:[%s117 + $0x3b0] sm:$0xff]
        %v257 = vld [vmem:[%s117 + $0x3b8] sm:$0xff]
        %v258 = vld [vmem:[%s117 + $0x3c0] sm:$0xff]
        %v259 = vld [vmem:[%s117 + $0x3c8] sm:$0xff]
        %v260 = vld [vmem:[%s117 + $0x3d0] sm:$0xff]
        %v261 = vld [vmem:[%s117 + $0x3d8] sm:$0xff]
        %v262 = vld [vmem:[%s117 + $0x3e0] sm:$0xff]
        %v263 = vld [vmem:[%s117 + $0x3e8] sm:$0xff]
        %v264 = vld [vmem:[%s117 + $0x3f0] sm:$0xff]
        %v265 = vld [vmem:[%s117 + $0x3f8] sm:$0xff]
        %v266 = vld [vmem:[%s117 + $0x400] sm:$0xff]
        %v267 = vld [vmem:[%s117 + $0x408] sm:$0xff]
        %v268 = vld [vmem:[%s117 + $0x410] sm:$0xff]
        %v269 = vld [vmem:[%s117 + $0x418] sm:$0xff]
        %v270 = vld [vmem:[%s117 + $0x420] sm:$0xff]
        %v271 = vld [vmem:[%s117 + $0x428] sm:$0xff]
        %v272 = vld [vmem:[%s117 + $0x430] sm:$0xff]
        %v273 = vld [vmem:[%s117 + $0x438] sm:$0xff]
        %v274 = vld [vmem:[%s117 + $0x440] sm:$0xff]
        %v275 = vld [vmem:[%s117 + $0x448] sm:$0xff]
        %v276 = vld [vmem:[%s117 + $0x450] sm:$0xff]
        %v277 = vld [vmem:[%s117 + $0x458] sm:$0xff]
        %v278 = vld [vmem:[%s117 + $0x460] sm:$0xff]
        %v279 = vld [vmem:[%s117 + $0x468] sm:$0xff]
        %v280 = vld [vmem:[%s117 + $0x470] sm:$0xff]
        %v281 = vld [vmem:[%s117 + $0x478] sm:$0xff]
        %v282 = vld [vmem:[%s117 + $0x480] sm:$0xff]
        %v283 = vld [vmem:[%s117 + $0x488] sm:$0xff]
        %v284 = vld [vmem:[%s117 + $0x490] sm:$0xff]
        %v285 = vld [vmem:[%s117 + $0x498] sm:$0xff]
        %v286 = vld [vmem:[%s117 + $0x4a0] sm:$0xff]
        %v287 = vld [vmem:[%s117 + $0x4a8] sm:$0xff]
        %v288 = vld [vmem:[%s117 + $0x4b0] sm:$0xff]
        %v289 = vld [vmem:[%s117 + $0x4b8] sm:$0xff]
        %v290 = vld [vmem:[%s117 + $0x4c0] sm:$0xff]
        %v291 = vld [vmem:[%s117 + $0x4c8] sm:$0xff]
        %v292 = vld [vmem:[%s117 + $0x4d0] sm:$0xff]
        %v293 = vld [vmem:[%s117 + $0x4d8] sm:$0xff]
        %v294 = vld [vmem:[%s117 + $0x4e0] sm:$0xff]
        %v295 = vld [vmem:[%s117 + $0x4e8] sm:$0xff]
        %v296 = vld [vmem:[%s117 + $0x4f0] sm:$0xff]
        %v297 = vld [vmem:[%s117 + $0x4f8] sm:$0xff]
        %v298 = vld [vmem:[%s117 + $0x500] sm:$0xff]
        %v299 = vld [vmem:[%s117 + $0x508] sm:$0xff]
        %v300 = vld [vmem:[%s117 + $0x510] sm:$0xff]
        %v301 = vld [vmem:[%s117 + $0x518] sm:$0xff]
        %v302 = vld [vmem:[%s117 + $0x520] sm:$0xff]
        %v303 = vld [vmem:[%s117 + $0x528] sm:$0xff]
        %v304 = vld [vmem:[%s117 + $0x530] sm:$0xff]
        %v305 = vld [vmem:[%s117 + $0x538] sm:$0xff]
        %v306 = vld [vmem:[%s117 + $0x540] sm:$0xff]
        %v307 = vld [vmem:[%s117 + $0x548] sm:$0xff]
        %v308 = vld [vmem:[%s117 + $0x550] sm:$0xff]
        %v309 = vld [vmem:[%s117 + $0x558] sm:$0xff]
        %v310 = vld [vmem:[%s117 + $0x560] sm:$0xff]
        %v311 = vld [vmem:[%s117 + $0x568] sm:$0xff]
        %v312 = vld [vmem:[%s117 + $0x570] sm:$0xff]
        %v313 = vld [vmem:[%s117 + $0x578] sm:$0xff]
        %v314 = vld [vmem:[%s117 + $0x580] sm:$0xff]
        %v315 = vld [vmem:[%s117 + $0x588] sm:$0xff]
        %v316 = vld [vmem:[%s117 + $0x590] sm:$0xff]
        %v317 = vld [vmem:[%s117 + $0x598] sm:$0xff]
        %v318 = vld [vmem:[%s117 + $0x5a0] sm:$0xff]
        %v319 = vld [vmem:[%s117 + $0x5a8] sm:$0xff]
        %v320 = vld [vmem:[%s117 + $0x5b0] sm:$0xff]
        %v321 = vld [vmem:[%s117 + $0x5b8] sm:$0xff]
        %v322 = vld [vmem:[%s117 + $0x5c0] sm:$0xff]
        %v323 = vld [vmem:[%s117 + $0x5c8] sm:$0xff]
        %v324 = vld [vmem:[%s117 + $0x5d0] sm:$0xff]
        %v325 = vld [vmem:[%s117 + $0x5d8] sm:$0xff]
        %v326 = vld [vmem:[%s117 + $0x5e0] sm:$0xff]
        %v327 = vld [vmem:[%s117 + $0x5e8] sm:$0xff]
        %v328 = vld [vmem:[%s117 + $0x5f0] sm:$0xff]
        %v329 = vld [vmem:[%s117 + $0x5f8] sm:$0xff]
        %v330 = vld [vmem:[%s117 + $0x600] sm:$0xff]
        %v331 = vld [vmem:[%s117 + $0x608] sm:$0xff]
        %v332 = vld [vmem:[%s117 + $0x610] sm:$0xff]
        %v333 = vld [vmem:[%s117 + $0x618] sm:$0xff]
        %v334 = vld [vmem:[%s117 + $0x620] sm:$0xff]
        %v335 = vld [vmem:[%s117 + $0x628] sm:$0xff]
        %v336 = vld [vmem:[%s117 + $0x630] sm:$0xff]
        %v337 = vld [vmem:[%s117 + $0x638] sm:$0xff]
        %v338 = vld [vmem:[%s117 + $0x640] sm:$0xff]
        %v339 = vld [vmem:[%s117 + $0x648] sm:$0xff]
        %v340 = vld [vmem:[%s117 + $0x650] sm:$0xff]
        %v341 = vld [vmem:[%s117 + $0x658] sm:$0xff]
        %v342 = vld [vmem:[%s117 + $0x660] sm:$0xff]
        %v343 = vld [vmem:[%s117 + $0x668] sm:$0xff]
        %v344 = vld [vmem:[%s117 + $0x670] sm:$0xff]
        %v345 = vld [vmem:[%s117 + $0x678] sm:$0xff]
        %v346 = vld [vmem:[%s117 + $0x680] sm:$0xff]
        %v347 = vld [vmem:[%s117 + $0x688] sm:$0xff]
        %v348 = vld [vmem:[%s117 + $0x690] sm:$0xff]
        %v349 = vld [vmem:[%s117 + $0x698] sm:$0xff]
        %v350 = vld [vmem:[%s117 + $0x6a0] sm:$0xff]
        %v351 = vld [vmem:[%s117 + $0x6a8] sm:$0xff]
        %v352 = vld [vmem:[%s117 + $0x6b0] sm:$0xff]
        %v353 = vld [vmem:[%s117 + $0x6b8] sm:$0xff]
        %v354 = vld [vmem:[%s117 + $0x6c0] sm:$0xff]
        %v355 = vld [vmem:[%s117 + $0x6c8] sm:$0xff]
        %v356 = vld [vmem:[%s117 + $0x6d0] sm:$0xff]
        %v357 = vld [vmem:[%s117 + $0x6d8] sm:$0xff]
        %v358 = vld [vmem:[%s117 + $0x6e0] sm:$0xff]
        %v359 = vld [vmem:[%s117 + $0x6e8] sm:$0xff]
        %v360 = vld [vmem:[%s117 + $0x6f0] sm:$0xff]
        %v361 = vld [vmem:[%s117 + $0x6f8] sm:$0xff]
        %v362 = vld [vmem:[%s117 + $0x700] sm:$0xff]
        %v363 = vld [vmem:[%s117 + $0x708] sm:$0xff]
        %v364 = vld [vmem:[%s117 + $0x710] sm:$0xff]
        %v365 = vld [vmem:[%s117 + $0x718] sm:$0xff]
        %v366 = vld [vmem:[%s117 + $0x720] sm:$0xff]
        %v367 = vld [vmem:[%s117 + $0x728] sm:$0xff]
        %v368 = vld [vmem:[%s117 + $0x730] sm:$0xff]
        %v369 = vld [vmem:[%s117 + $0x738] sm:$0xff]
        %v370 = vld [vmem:[%s117 + $0x740] sm:$0xff]
        %v371 = vld [vmem:[%s117 + $0x748] sm:$0xff]
        %v372 = vld [vmem:[%s117 + $0x750] sm:$0xff]
        %v373 = vld [vmem:[%s117 + $0x758] sm:$0xff]
        %v374 = vld [vmem:[%s117 + $0x760] sm:$0xff]
        %v375 = vld [vmem:[%s117 + $0x768] sm:$0xff]
        %v376 = vld [vmem:[%s117 + $0x770] sm:$0xff]
        %v377 = vld [vmem:[%s117 + $0x778] sm:$0xff]
        %v378 = vld [vmem:[%s117 + $0x780] sm:$0xff]
        %v379 = vld [vmem:[%s117 + $0x788] sm:$0xff]
        %v380 = vld [vmem:[%s117 + $0x790] sm:$0xff]
        %v381 = vld [vmem:[%s117 + $0x798] sm:$0xff]
        %v382 = vld [vmem:[%s117 + $0x7a0] sm:$0xff]
        %v383 = vld [vmem:[%s117 + $0x7a8] sm:$0xff]
        %v384 = vld [vmem:[%s117 + $0x7b0] sm:$0xff]
        %v385 = vld [vmem:[%s117 + $0x7b8] sm:$0xff]
        %v386 = vld [vmem:[%s117 + $0x7c0] sm:$0xff]
        %v387 = vld [vmem:[%s117 + $0x7c8] sm:$0xff]
        %v388 = vld [vmem:[%s117 + $0x7d0] sm:$0xff]
        %v389 = vld [vmem:[%s117 + $0x7d8] sm:$0xff]
        %v390 = vld [vmem:[%s117 + $0x7e0] sm:$0xff]
        %v391 = vld [vmem:[%s117 + $0x7e8] sm:$0xff]
        %v392 = vld [vmem:[%s117 + $0x7f0] sm:$0xff]
        %v393 = vld [vmem:[%s117 + $0x7f8] sm:$0xff]
        %v394 = vld [vmem:[%s117 + $0x800] sm:$0xff]
        %v395 = vld [vmem:[%s117 + $0x808] sm:$0xff]
        %v396 = vld [vmem:[%s117 + $0x810] sm:$0xff]
        %v397 = vld [vmem:[%s117 + $0x818] sm:$0xff]
        %v398 = vld [vmem:[%s117 + $0x820] sm:$0xff]
        %v399 = vld [vmem:[%s117 + $0x828] sm:$0xff]
        %v400 = vld [vmem:[%s117 + $0x830] sm:$0xff]
        %v401 = vld [vmem:[%s117 + $0x838] sm:$0xff]
        %v402 = vld [vmem:[%s117 + $0x840] sm:$0xff]
        %v403 = vld [vmem:[%s117 + $0x848] sm:$0xff]
        %v404 = vld [vmem:[%s117 + $0x850] sm:$0xff]
        %v405 = vld [vmem:[%s117 + $0x858] sm:$0xff]
        %v406 = vld [vmem:[%s117 + $0x860] sm:$0xff]
        %v407 = vld [vmem:[%s117 + $0x868] sm:$0xff]
        %v408 = vld [vmem:[%s117 + $0x870] sm:$0xff]
        %v409 = vld [vmem:[%s117 + $0x878] sm:$0xff]
        %v410 = vld [vmem:[%s117 + $0x880] sm:$0xff]
        %v411 = vld [vmem:[%s117 + $0x888] sm:$0xff]
        %v412 = vld [vmem:[%s117 + $0x890] sm:$0xff]
        %v413 = vld [vmem:[%s117 + $0x898] sm:$0xff]
        %v414 = vld [vmem:[%s117 + $0x8a0] sm:$0xff]
        %v415 = vld [vmem:[%s117 + $0x8a8] sm:$0xff]
        %v416 = vld [vmem:[%s117 + $0x8b0] sm:$0xff]
        %v417 = vld [vmem:[%s117 + $0x8b8] sm:$0xff]
        %v418 = vld [vmem:[%s117 + $0x8c0] sm:$0xff]
        %v419 = vld [vmem:[%s117 + $0x8c8] sm:$0xff]
        %v420 = vld [vmem:[%s117 + $0x8d0] sm:$0xff]
        %v421 = vld [vmem:[%s117 + $0x8d8] sm:$0xff]
        %v422 = vld [vmem:[%s117 + $0x8e0] sm:$0xff]
        %v423 = vld [vmem:[%s117 + $0x8e8] sm:$0xff]
        %v424 = vld [vmem:[%s117 + $0x8f0] sm:$0xff]
        %v425 = vld [vmem:[%s117 + $0x8f8] sm:$0xff]
        %v426 = vld [vmem:[%s117 + $0x900] sm:$0xff]
        %v427 = vld [vmem:[%s117 + $0x908] sm:$0xff]
        %v428 = vld [vmem:[%s117 + $0x910] sm:$0xff]
        %v429 = vld [vmem:[%s117 + $0x918] sm:$0xff]
        %v430 = vld [vmem:[%s117 + $0x920] sm:$0xff]
        %v431 = vld [vmem:[%s117 + $0x928] sm:$0xff]
        %v432 = vld [vmem:[%s117 + $0x930] sm:$0xff]
        %v433 = vld [vmem:[%s117 + $0x938] sm:$0xff]
        %v434 = vld [vmem:[%s117 + $0x940] sm:$0xff]
        %v435 = vld [vmem:[%s117 + $0x948] sm:$0xff]
        %v436 = vld [vmem:[%s117 + $0x950] sm:$0xff]
        %v437 = vld [vmem:[%s117 + $0x958] sm:$0xff]
        %v438 = vld [vmem:[%s117 + $0x960] sm:$0xff]
        %v439 = vld [vmem:[%s117 + $0x968] sm:$0xff]
        %v440 = vld [vmem:[%s117 + $0x970] sm:$0xff]
        %v441 = vld [vmem:[%s117 + $0x978] sm:$0xff]
        %v442 = vld [vmem:[%s117 + $0x980] sm:$0xff]
        %v443 = vld [vmem:[%s117 + $0x988] sm:$0xff]
        %v444 = vld [vmem:[%s117 + $0x990] sm:$0xff]
        %v445 = vld [vmem:[%s117 + $0x998] sm:$0xff]
        %v446 = vld [vmem:[%s117 + $0x9a0] sm:$0xff]
        %v447 = vld [vmem:[%s117 + $0x9a8] sm:$0xff]
        %v448 = vld [vmem:[%s117 + $0x9b0] sm:$0xff]
        %v449 = vld [vmem:[%s117 + $0x9b8] sm:$0xff]
        %v450 = vld [vmem:[%s117 + $0x9c0] sm:$0xff]
        %v451 = vld [vmem:[%s117 + $0x9c8] sm:$0xff]
        %v452 = vld [vmem:[%s117 + $0x9d0] sm:$0xff]
        %v453 = vld [vmem:[%s117 + $0x9d8] sm:$0xff]
        %v454 = vld [vmem:[%s117 + $0x9e0] sm:$0xff]
        %v455 = vld [vmem:[%s117 + $0x9e8] sm:$0xff]
        %v456 = vld [vmem:[%s117 + $0x9f0] sm:$0xff]
        %v457 = vld [vmem:[%s117 + $0x9f8] sm:$0xff]
        %v458 = vld [vmem:[%s117 + $0xa00] sm:$0xff]
        %v459 = vld [vmem:[%s117 + $0xa08] sm:$0xff]
        %v460 = vld [vmem:[%s117 + $0xa10] sm:$0xff]
        %v461 = vld [vmem:[%s117 + $0xa18] sm:$0xff]
        %v462 = vld [vmem:[%s117 + $0xa20] sm:$0xff]
        %v463 = vld [vmem:[%s117 + $0xa28] sm:$0xff]
        %v464 = vld [vmem:[%s117 + $0xa30] sm:$0xff]
        %v465 = vld [vmem:[%s117 + $0xa38] sm:$0xff]
        %v466 = vld [vmem:[%s117 + $0xa40] sm:$0xff]
        %v467 = vld [vmem:[%s117 + $0xa48] sm:$0xff]
        %v468 = vld [vmem:[%s117 + $0xa50] sm:$0xff]
        %v469 = vld [vmem:[%s117 + $0xa58] sm:$0xff]
        %v470 = vld [vmem:[%s117 + $0xa60] sm:$0xff]
        %v471 = vld [vmem:[%s117 + $0xa68] sm:$0xff]
        %v472 = vld [vmem:[%s117 + $0xa70] sm:$0xff]
        %v473 = vld [vmem:[%s117 + $0xa78] sm:$0xff]
        %v474 = vld [vmem:[%s117 + $0xa80] sm:$0xff]
        %v475 = vld [vmem:[%s117 + $0xa88] sm:$0xff]
        %v476 = vld [vmem:[%s117 + $0xa90] sm:$0xff]
        %v477 = vld [vmem:[%s117 + $0xa98] sm:$0xff]
        %v478 = vld [vmem:[%s117 + $0xaa0] sm:$0xff]
        %v479 = vld [vmem:[%s117 + $0xaa8] sm:$0xff]
        %v480 = vld [vmem:[%s117 + $0xab0] sm:$0xff]
        %v481 = vld [vmem:[%s117 + $0xab8] sm:$0xff]
        %v482 = vld [vmem:[%s117 + $0xac0] sm:$0xff]
        %v483 = vld [vmem:[%s117 + $0xac8] sm:$0xff]
        %v484 = vld [vmem:[%s117 + $0xad0] sm:$0xff]
        %v485 = vld [vmem:[%s117 + $0xad8] sm:$0xff]
        %v486 = vld [vmem:[%s117 + $0xae0] sm:$0xff]
        %v487 = vld [vmem:[%s117 + $0xae8] sm:$0xff]
        %v488 = vld [vmem:[%s117 + $0xaf0] sm:$0xff]
        %v489 = vld [vmem:[%s117 + $0xaf8] sm:$0xff]
        %v490 = vld [vmem:[%s117 + $0xb00] sm:$0xff]
        %v491 = vld [vmem:[%s117 + $0xb08] sm:$0xff]
        %v492 = vld [vmem:[%s117 + $0xb10] sm:$0xff]
        %v493 = vld [vmem:[%s117 + $0xb18] sm:$0xff]
        %v494 = vld [vmem:[%s117 + $0xb20] sm:$0xff]
        %v495 = vld [vmem:[%s117 + $0xb28] sm:$0xff]
        %v496 = vld [vmem:[%s117 + $0xb30] sm:$0xff]
        %v497 = vld [vmem:[%s117 + $0xb38] sm:$0xff]
        %v498 = vld [vmem:[%s117 + $0xb40] sm:$0xff]
        %v499 = vld [vmem:[%s117 + $0xb48] sm:$0xff]
        %v500 = vld [vmem:[%s117 + $0xb50] sm:$0xff]
        %v501 = vld [vmem:[%s117 + $0xb58] sm:$0xff]
        %v502 = vld [vmem:[%s117 + $0xb60] sm:$0xff]
        %v503 = vld [vmem:[%s117 + $0xb68] sm:$0xff]
        %v504 = vld [vmem:[%s117 + $0xb70] sm:$0xff]
        %v505 = vld [vmem:[%s117 + $0xb78] sm:$0xff]
        %v506 = vld [vmem:[%s117 + $0xb80] sm:$0xff]
        %v507 = vld [vmem:[%s117 + $0xb88] sm:$0xff]
        %v508 = vld [vmem:[%s117 + $0xb90] sm:$0xff]
        %v509 = vld [vmem:[%s117 + $0xb98] sm:$0xff]
        %v510 = vld [vmem:[%s117 + $0xba0] sm:$0xff]
        %v511 = vld [vmem:[%s117 + $0xba8] sm:$0xff]
        %v512 = vld [vmem:[%s117 + $0xbb0] sm:$0xff]
        %v513 = vld [vmem:[%s117 + $0xbb8] sm:$0xff]
        %v514 = vld [vmem:[%s117 + $0xbc0] sm:$0xff]
        %v515 = vld [vmem:[%s117 + $0xbc8] sm:$0xff]
        %v516 = vld [vmem:[%s117 + $0xbd0] sm:$0xff]
        %v517 = vld [vmem:[%s117 + $0xbd8] sm:$0xff]
        %v518 = vld [vmem:[%s117 + $0xbe0] sm:$0xff]
        %v519 = vld [vmem:[%s117 + $0xbe8] sm:$0xff]
        %v520 = vld [vmem:[%s117 + $0xbf0] sm:$0xff]
        %v521 = vld [vmem:[%s117 + $0xbf8] sm:$0xff]
        %v522 = vld [vmem:[%s117 + $0xc00] sm:$0xff]
        %v523 = vld [vmem:[%s117 + $0xc08] sm:$0xff]
        %v524 = vld [vmem:[%s117 + $0xc10] sm:$0xff]
        %v525 = vld [vmem:[%s117 + $0xc18] sm:$0xff]
        %v526 = vld [vmem:[%s117 + $0xc20] sm:$0xff]
        %v527 = vld [vmem:[%s117 + $0xc28] sm:$0xff]
        %v528 = vld [vmem:[%s117 + $0xc30] sm:$0xff]
        %v529 = vld [vmem:[%s117 + $0xc38] sm:$0xff]
        %v530 = vld [vmem:[%s117 + $0xc40] sm:$0xff]
        %v531 = vld [vmem:[%s117 + $0xc48] sm:$0xff]
        %v532 = vld [vmem:[%s117 + $0xc50] sm:$0xff]
        %v533 = vld [vmem:[%s117 + $0xc58] sm:$0xff]
        %v534 = vld [vmem:[%s117 + $0xc60] sm:$0xff]
        %v535 = vld [vmem:[%s117 + $0xc68] sm:$0xff]
        %v536 = vld [vmem:[%s117 + $0xc70] sm:$0xff]
        %v537 = vld [vmem:[%s117 + $0xc78] sm:$0xff]
        %v538 = vld [vmem:[%s117 + $0xc80] sm:$0xff]
        %v539 = vld [vmem:[%s117 + $0xc88] sm:$0xff]
        %v540 = vld [vmem:[%s117 + $0xc90] sm:$0xff]
        %v541 = vld [vmem:[%s117 + $0xc98] sm:$0xff]
        %v542 = vld [vmem:[%s117 + $0xca0] sm:$0xff]
        %v543 = vld [vmem:[%s117 + $0xca8] sm:$0xff]
        %v544 = vld [vmem:[%s117 + $0xcb0] sm:$0xff]
        %v545 = vld [vmem:[%s117 + $0xcb8] sm:$0xff]
        %v546 = vld [vmem:[%s117 + $0xcc0] sm:$0xff]
        %v547 = vld [vmem:[%s117 + $0xcc8] sm:$0xff]
        %v548 = vld [vmem:[%s117 + $0xcd0] sm:$0xff]
        %v549 = vld [vmem:[%s117 + $0xcd8] sm:$0xff]
        %v550 = vld [vmem:[%s117 + $0xce0] sm:$0xff]
        %v551 = vld [vmem:[%s117 + $0xce8] sm:$0xff]
        %v552 = vld [vmem:[%s117 + $0xcf0] sm:$0xff]
        %v553 = vld [vmem:[%s117 + $0xcf8] sm:$0xff]
        %v554 = vld [vmem:[%s117 + $0xd00] sm:$0xff]
        %v555 = vld [vmem:[%s117 + $0xd08] sm:$0xff]
        %v556 = vld [vmem:[%s117 + $0xd10] sm:$0xff]
        %v557 = vld [vmem:[%s117 + $0xd18] sm:$0xff]
        %v558 = vld [vmem:[%s117 + $0xd20] sm:$0xff]
        %v559 = vld [vmem:[%s117 + $0xd28] sm:$0xff]
        %v560 = vld [vmem:[%s117 + $0xd30] sm:$0xff]
        %v561 = vld [vmem:[%s117 + $0xd38] sm:$0xff]
        %v562 = vld [vmem:[%s117 + $0xd40] sm:$0xff]
        %v563 = vld [vmem:[%s117 + $0xd48] sm:$0xff]
        %v564 = vld [vmem:[%s117 + $0xd50] sm:$0xff]
        %v565 = vld [vmem:[%s117 + $0xd58] sm:$0xff]
        %v566 = vld [vmem:[%s117 + $0xd60] sm:$0xff]
        %v567 = vld [vmem:[%s117 + $0xd68] sm:$0xff]
        %v568 = vld [vmem:[%s117 + $0xd70] sm:$0xff]
        %v569 = vld [vmem:[%s117 + $0xd78] sm:$0xff]
        %v570 = vld [vmem:[%s117 + $0xd80] sm:$0xff]
        %v571 = vld [vmem:[%s117 + $0xd88] sm:$0xff]
        %v572 = vld [vmem:[%s117 + $0xd90] sm:$0xff]
        %v573 = vld [vmem:[%s117 + $0xd98] sm:$0xff]
        %v574 = vld [vmem:[%s117 + $0xda0] sm:$0xff]
        %v575 = vld [vmem:[%s117 + $0xda8] sm:$0xff]
        %v576 = vld [vmem:[%s117 + $0xdb0] sm:$0xff]
        %v577 = vld [vmem:[%s117 + $0xdb8] sm:$0xff]
        %v578 = vld [vmem:[%s117 + $0xdc0] sm:$0xff]
        %v579 = vld [vmem:[%s117 + $0xdc8] sm:$0xff]
        %v580 = vld [vmem:[%s117 + $0xdd0] sm:$0xff]
        %v581 = vld [vmem:[%s117 + $0xdd8] sm:$0xff]
        %v582 = vld [vmem:[%s117 + $0xde0] sm:$0xff]
        %v583 = vld [vmem:[%s117 + $0xde8] sm:$0xff]
        %v584 = vld [vmem:[%s117 + $0xdf0] sm:$0xff]
        %v585 = vld [vmem:[%s117 + $0xdf8] sm:$0xff]
        %v586 = vld [vmem:[%s117 + $0xe00] sm:$0xff]
        %v587 = vld [vmem:[%s117 + $0xe08] sm:$0xff]
        %v588 = vld [vmem:[%s117 + $0xe10] sm:$0xff]
        %v589 = vld [vmem:[%s117 + $0xe18] sm:$0xff]
        %v590 = vld [vmem:[%s117 + $0xe20] sm:$0xff]
        %v591 = vld [vmem:[%s117 + $0xe28] sm:$0xff]
        %v592 = vld [vmem:[%s117 + $0xe30] sm:$0xff]
        %v593 = vld [vmem:[%s117 + $0xe38] sm:$0xff]
        %v594 = vld [vmem:[%s117 + $0xe40] sm:$0xff]
        %v595 = vld [vmem:[%s117 + $0xe48] sm:$0xff]
        %v596 = vld [vmem:[%s117 + $0xe50] sm:$0xff]
        %v597 = vld [vmem:[%s117 + $0xe58] sm:$0xff]
        %v598 = vld [vmem:[%s117 + $0xe60] sm:$0xff]
        %v599 = vld [vmem:[%s117 + $0xe68] sm:$0xff]
        %v600 = vld [vmem:[%s117 + $0xe70] sm:$0xff]
        %v601 = vld [vmem:[%s117 + $0xe78] sm:$0xff]
        %v602 = vld [vmem:[%s117 + $0xe80] sm:$0xff]
        %v603 = vld [vmem:[%s117 + $0xe88] sm:$0xff]
        %v604 = vld [vmem:[%s117 + $0xe90] sm:$0xff]
        %v605 = vld [vmem:[%s117 + $0xe98] sm:$0xff]
        %v606 = vld [vmem:[%s117 + $0xea0] sm:$0xff]
        %v607 = vld [vmem:[%s117 + $0xea8] sm:$0xff]
        %v608 = vld [vmem:[%s117 + $0xeb0] sm:$0xff]
        %v609 = vld [vmem:[%s117 + $0xeb8] sm:$0xff]
        %v610 = vld [vmem:[%s117 + $0xec0] sm:$0xff]
        %v611 = vld [vmem:[%s117 + $0xec8] sm:$0xff]
        %v612 = vld [vmem:[%s117 + $0xed0] sm:$0xff]
        %v613 = vld [vmem:[%s117 + $0xed8] sm:$0xff]
        %v614 = vld [vmem:[%s117 + $0xee0] sm:$0xff]
        %v615 = vld [vmem:[%s117 + $0xee8] sm:$0xff]
        %v616 = vld [vmem:[%s117 + $0xef0] sm:$0xff]
        %v617 = vld [vmem:[%s117 + $0xef8] sm:$0xff]
        %v618 = vld [vmem:[%s117 + $0xf00] sm:$0xff]
        %v619 = vld [vmem:[%s117 + $0xf08] sm:$0xff]
        %v620 = vld [vmem:[%s117 + $0xf10] sm:$0xff]
        %v621 = vld [vmem:[%s117 + $0xf18] sm:$0xff]
        %v622 = vld [vmem:[%s117 + $0xf20] sm:$0xff]
        %v623 = vld [vmem:[%s117 + $0xf28] sm:$0xff]
        %v624 = vld [vmem:[%s117 + $0xf30] sm:$0xff]
        %v625 = vld [vmem:[%s117 + $0xf38] sm:$0xff]
        %v626 = vld [vmem:[%s117 + $0xf40] sm:$0xff]
        %v627 = vld [vmem:[%s117 + $0xf48] sm:$0xff]
        %v628 = vld [vmem:[%s117 + $0xf50] sm:$0xff]
        %v629 = vld [vmem:[%s117 + $0xf58] sm:$0xff]
        %v630 = vld [vmem:[%s117 + $0xf60] sm:$0xff]
        %v631 = vld [vmem:[%s117 + $0xf68] sm:$0xff]
        %v632 = vld [vmem:[%s117 + $0xf70] sm:$0xff]
        %v633 = vld [vmem:[%s117 + $0xf78] sm:$0xff]
        %v634 = vld [vmem:[%s117 + $0xf80] sm:$0xff]
        %v635 = vld [vmem:[%s117 + $0xf88] sm:$0xff]
        %v636 = vld [vmem:[%s117 + $0xf90] sm:$0xff]
        %v637 = vld [vmem:[%s117 + $0xf98] sm:$0xff]
        %v638 = vld [vmem:[%s117 + $0xfa0] sm:$0xff]
        %v639 = vld [vmem:[%s117 + $0xfa8] sm:$0xff]
        %v640 = vld [vmem:[%s117 + $0xfb0] sm:$0xff]
        %v641 = vld [vmem:[%s117 + $0xfb8] sm:$0xff]
        %v642 = vld [vmem:[%s117 + $0xfc0] sm:$0xff]
        %v643 = vld [vmem:[%s117 + $0xfc8] sm:$0xff]
        %v644 = vld [vmem:[%s117 + $0xfd0] sm:$0xff]
        %v645 = vld [vmem:[%s117 + $0xfd8] sm:$0xff]
        %v646 = vld [vmem:[%s117 + $0xfe0] sm:$0xff]
        %v647 = vld [vmem:[%s117 + $0xfe8] sm:$0xff]
        %v648 = vld [vmem:[%s117 + $0xff0] sm:$0xff]
        %v649 = vld [vmem:[%s117 + $0xff8] sm:$0xff]
        %v650 = vadd.f32 %v138, 0.999
        %v651 = vadd.f32 %v139, 0.999
        %v652 = vadd.f32 %v140, 0.999
        %v653 = vadd.f32 %v141, 0.999
        %v654 = vadd.f32 %v142, 0.999
        %v655 = vadd.f32 %v143, 0.999
        %v656 = vadd.f32 %v144, 0.999
        %v657 = vadd.f32 %v145, 0.999
        %v658 = vadd.f32 %v146, 0.999
        %v659 = vadd.f32 %v147, 0.999
        %v660 = vadd.f32 %v148, 0.999
        %v661 = vadd.f32 %v149, 0.999
        %v662 = vadd.f32 %v150, 0.999
        %v663 = vadd.f32 %v151, 0.999
        %v664 = vadd.f32 %v152, 0.999
        %v665 = vadd.f32 %v153, 0.999
        %v666 = vadd.f32 %v154, 0.999
        %v667 = vadd.f32 %v155, 0.999
        %v668 = vadd.f32 %v156, 0.999
        %v669 = vadd.f32 %v157, 0.999
        %v670 = vadd.f32 %v158, 0.999
        %v671 = vadd.f32 %v159, 0.999
        %v672 = vadd.f32 %v160, 0.999
        %v673 = vadd.f32 %v161, 0.999
        %v674 = vadd.f32 %v162, 0.999
        %v675 = vadd.f32 %v163, 0.999
        %v676 = vadd.f32 %v164, 0.999
        %v677 = vadd.f32 %v165, 0.999
        %v678 = vadd.f32 %v166, 0.999
        %v679 = vadd.f32 %v167, 0.999
        %v680 = vadd.f32 %v168, 0.999
        %v681 = vadd.f32 %v169, 0.999
        %v682 = vadd.f32 %v170, 0.999
        %v683 = vadd.f32 %v171, 0.999
        %v684 = vadd.f32 %v172, 0.999
        %v685 = vadd.f32 %v173, 0.999
        %v686 = vadd.f32 %v174, 0.999
        %v687 = vadd.f32 %v175, 0.999
        %v688 = vadd.f32 %v176, 0.999
        %v689 = vadd.f32 %v177, 0.999
        %v690 = vadd.f32 %v178, 0.999
        %v691 = vadd.f32 %v179, 0.999
        %v692 = vadd.f32 %v180, 0.999
        %v693 = vadd.f32 %v181, 0.999
        %v694 = vadd.f32 %v182, 0.999
        %v695 = vadd.f32 %v183, 0.999
        %v696 = vadd.f32 %v184, 0.999
        %v697 = vadd.f32 %v185, 0.999
        %v698 = vadd.f32 %v186, 0.999
        %v699 = vadd.f32 %v187, 0.999
        %v700 = vadd.f32 %v188, 0.999
        %v701 = vadd.f32 %v189, 0.999
        %v702 = vadd.f32 %v190, 0.999
        %v703 = vadd.f32 %v191, 0.999
        %v704 = vadd.f32 %v192, 0.999
        %v705 = vadd.f32 %v193, 0.999
        %v706 = vadd.f32 %v194, 0.999
        %v707 = vadd.f32 %v195, 0.999
        %v708 = vadd.f32 %v196, 0.999
        %v709 = vadd.f32 %v197, 0.999
        %v710 = vadd.f32 %v198, 0.999
        %v711 = vadd.f32 %v199, 0.999
        %v712 = vadd.f32 %v200, 0.999
        %v713 = vadd.f32 %v201, 0.999
        %v714 = vadd.f32 %v202, 0.999
        %v715 = vadd.f32 %v203, 0.999
        %v716 = vadd.f32 %v204, 0.999
        %v717 = vadd.f32 %v205, 0.999
        %v718 = vadd.f32 %v206, 0.999
        %v719 = vadd.f32 %v207, 0.999
        %v720 = vadd.f32 %v208, 0.999
        %v721 = vadd.f32 %v209, 0.999
        %v722 = vadd.f32 %v210, 0.999
        %v723 = vadd.f32 %v211, 0.999
        %v724 = vadd.f32 %v212, 0.999
        %v725 = vadd.f32 %v213, 0.999
        %v726 = vadd.f32 %v214, 0.999
        %v727 = vadd.f32 %v215, 0.999
        %v728 = vadd.f32 %v216, 0.999
        %v729 = vadd.f32 %v217, 0.999
        %v730 = vadd.f32 %v218, 0.999
        %v731 = vadd.f32 %v219, 0.999
        %v732 = vadd.f32 %v220, 0.999
        %v733 = vadd.f32 %v221, 0.999
        %v734 = vadd.f32 %v222, 0.999
        %v735 = vadd.f32 %v223, 0.999
        %v736 = vadd.f32 %v224, 0.999
        %v737 = vadd.f32 %v225, 0.999
        %v738 = vadd.f32 %v226, 0.999
        %v739 = vadd.f32 %v227, 0.999
        %v740 = vadd.f32 %v228, 0.999
        %v741 = vadd.f32 %v229, 0.999
        %v742 = vadd.f32 %v230, 0.999
        %v743 = vadd.f32 %v231, 0.999
        %v744 = vadd.f32 %v232, 0.999
        %v745 = vadd.f32 %v233, 0.999
        %v746 = vadd.f32 %v234, 0.999
        %v747 = vadd.f32 %v235, 0.999
        %v748 = vadd.f32 %v236, 0.999
        %v749 = vadd.f32 %v237, 0.999
        %v750 = vadd.f32 %v238, 0.999
        %v751 = vadd.f32 %v239, 0.999
        %v752 = vadd.f32 %v240, 0.999
        %v753 = vadd.f32 %v241, 0.999
        %v754 = vadd.f32 %v242, 0.999
        %v755 = vadd.f32 %v243, 0.999
        %v756 = vadd.f32 %v244, 0.999
        %v757 = vadd.f32 %v245, 0.999
        %v758 = vadd.f32 %v246, 0.999
        %v759 = vadd.f32 %v247, 0.999
        %v760 = vadd.f32 %v248, 0.999
        %v761 = vadd.f32 %v249, 0.999
        %v762 = vadd.f32 %v250, 0.999
        %v763 = vadd.f32 %v251, 0.999
        %v764 = vadd.f32 %v252, 0.999
        %v765 = vadd.f32 %v253, 0.999
        %v766 = vadd.f32 %v254, 0.999
        %v767 = vadd.f32 %v255, 0.999
        %v768 = vadd.f32 %v256, 0.999
        %v769 = vadd.f32 %v257, 0.999
        %v770 = vadd.f32 %v258, 0.999
        %v771 = vadd.f32 %v259, 0.999
        %v772 = vadd.f32 %v260, 0.999
        %v773 = vadd.f32 %v261, 0.999
        %v774 = vadd.f32 %v262, 0.999
        %v775 = vadd.f32 %v263, 0.999
        %v776 = vadd.f32 %v264, 0.999
        %v777 = vadd.f32 %v265, 0.999
        %v778 = vadd.f32 %v266, 0.999
        %v779 = vadd.f32 %v267, 0.999
        %v780 = vadd.f32 %v268, 0.999
        %v781 = vadd.f32 %v269, 0.999
        %v782 = vadd.f32 %v270, 0.999
        %v783 = vadd.f32 %v271, 0.999
        %v784 = vadd.f32 %v272, 0.999
        %v785 = vadd.f32 %v273, 0.999
        %v786 = vadd.f32 %v274, 0.999
        %v787 = vadd.f32 %v275, 0.999
        %v788 = vadd.f32 %v276, 0.999
        %v789 = vadd.f32 %v277, 0.999
        %v790 = vadd.f32 %v278, 0.999
        %v791 = vadd.f32 %v279, 0.999
        %v792 = vadd.f32 %v280, 0.999
        %v793 = vadd.f32 %v281, 0.999
        %v794 = vadd.f32 %v282, 0.999
        %v795 = vadd.f32 %v283, 0.999
        %v796 = vadd.f32 %v284, 0.999
        %v797 = vadd.f32 %v285, 0.999
        %v798 = vadd.f32 %v286, 0.999
        %v799 = vadd.f32 %v287, 0.999
        %v800 = vadd.f32 %v288, 0.999
        %v801 = vadd.f32 %v289, 0.999
        %v802 = vadd.f32 %v290, 0.999
        %v803 = vadd.f32 %v291, 0.999
        %v804 = vadd.f32 %v292, 0.999
        %v805 = vadd.f32 %v293, 0.999
        %v806 = vadd.f32 %v294, 0.999
        %v807 = vadd.f32 %v295, 0.999
        %v808 = vadd.f32 %v296, 0.999
        %v809 = vadd.f32 %v297, 0.999
        %v810 = vadd.f32 %v298, 0.999
        %v811 = vadd.f32 %v299, 0.999
        %v812 = vadd.f32 %v300, 0.999
        %v813 = vadd.f32 %v301, 0.999
        %v814 = vadd.f32 %v302, 0.999
        %v815 = vadd.f32 %v303, 0.999
        %v816 = vadd.f32 %v304, 0.999
        %v817 = vadd.f32 %v305, 0.999
        %v818 = vadd.f32 %v306, 0.999
        %v819 = vadd.f32 %v307, 0.999
        %v820 = vadd.f32 %v308, 0.999
        %v821 = vadd.f32 %v309, 0.999
        %v822 = vadd.f32 %v310, 0.999
        %v823 = vadd.f32 %v311, 0.999
        %v824 = vadd.f32 %v312, 0.999
        %v825 = vadd.f32 %v313, 0.999
        %v826 = vadd.f32 %v314, 0.999
        %v827 = vadd.f32 %v315, 0.999
        %v828 = vadd.f32 %v316, 0.999
        %v829 = vadd.f32 %v317, 0.999
        %v830 = vadd.f32 %v318, 0.999
        %v831 = vadd.f32 %v319, 0.999
        %v832 = vadd.f32 %v320, 0.999
        %v833 = vadd.f32 %v321, 0.999
        %v834 = vadd.f32 %v322, 0.999
        %v835 = vadd.f32 %v323, 0.999
        %v836 = vadd.f32 %v324, 0.999
        %v837 = vadd.f32 %v325, 0.999
        %v838 = vadd.f32 %v326, 0.999
        %v839 = vadd.f32 %v327, 0.999
        %v840 = vadd.f32 %v328, 0.999
        %v841 = vadd.f32 %v329, 0.999
        %v842 = vadd.f32 %v330, 0.999
        %v843 = vadd.f32 %v331, 0.999
        %v844 = vadd.f32 %v332, 0.999
        %v845 = vadd.f32 %v333, 0.999
        %v846 = vadd.f32 %v334, 0.999
        %v847 = vadd.f32 %v335, 0.999
        %v848 = vadd.f32 %v336, 0.999
        %v849 = vadd.f32 %v337, 0.999
        %v850 = vadd.f32 %v338, 0.999
        %v851 = vadd.f32 %v339, 0.999
        %v852 = vadd.f32 %v340, 0.999
        %v853 = vadd.f32 %v341, 0.999
        %v854 = vadd.f32 %v342, 0.999
        %v855 = vadd.f32 %v343, 0.999
        %v856 = vadd.f32 %v344, 0.999
        %v857 = vadd.f32 %v345, 0.999
        %v858 = vadd.f32 %v346, 0.999
        %v859 = vadd.f32 %v347, 0.999
        %v860 = vadd.f32 %v348, 0.999
        %v861 = vadd.f32 %v349, 0.999
        %v862 = vadd.f32 %v350, 0.999
        %v863 = vadd.f32 %v351, 0.999
        %v864 = vadd.f32 %v352, 0.999
        %v865 = vadd.f32 %v353, 0.999
        %v866 = vadd.f32 %v354, 0.999
        %v867 = vadd.f32 %v355, 0.999
        %v868 = vadd.f32 %v356, 0.999
        %v869 = vadd.f32 %v357, 0.999
        %v870 = vadd.f32 %v358, 0.999
        %v871 = vadd.f32 %v359, 0.999
        %v872 = vadd.f32 %v360, 0.999
        %v873 = vadd.f32 %v361, 0.999
        %v874 = vadd.f32 %v362, 0.999
        %v875 = vadd.f32 %v363, 0.999
        %v876 = vadd.f32 %v364, 0.999
        %v877 = vadd.f32 %v365, 0.999
        %v878 = vadd.f32 %v366, 0.999
        %v879 = vadd.f32 %v367, 0.999
        %v880 = vadd.f32 %v368, 0.999
        %v881 = vadd.f32 %v369, 0.999
        %v882 = vadd.f32 %v370, 0.999
        %v883 = vadd.f32 %v371, 0.999
        %v884 = vadd.f32 %v372, 0.999
        %v885 = vadd.f32 %v373, 0.999
        %v886 = vadd.f32 %v374, 0.999
        %v887 = vadd.f32 %v375, 0.999
        %v888 = vadd.f32 %v376, 0.999
        %v889 = vadd.f32 %v377, 0.999
        %v890 = vadd.f32 %v378, 0.999
        %v891 = vadd.f32 %v379, 0.999
        %v892 = vadd.f32 %v380, 0.999
        %v893 = vadd.f32 %v381, 0.999
        %v894 = vadd.f32 %v382, 0.999
        %v895 = vadd.f32 %v383, 0.999
        %v896 = vadd.f32 %v384, 0.999
        %v897 = vadd.f32 %v385, 0.999
        %v898 = vadd.f32 %v386, 0.999
        %v899 = vadd.f32 %v387, 0.999
        %v900 = vadd.f32 %v388, 0.999
        %v901 = vadd.f32 %v389, 0.999
        %v902 = vadd.f32 %v390, 0.999
        %v903 = vadd.f32 %v391, 0.999
        %v904 = vadd.f32 %v392, 0.999
        %v905 = vadd.f32 %v393, 0.999
        %v906 = vadd.f32 %v394, 0.999
        %v907 = vadd.f32 %v395, 0.999
        %v908 = vadd.f32 %v396, 0.999
        %v909 = vadd.f32 %v397, 0.999
        %v910 = vadd.f32 %v398, 0.999
        %v911 = vadd.f32 %v399, 0.999
        %v912 = vadd.f32 %v400, 0.999
        %v913 = vadd.f32 %v401, 0.999
        %v914 = vadd.f32 %v402, 0.999
        %v915 = vadd.f32 %v403, 0.999
        %v916 = vadd.f32 %v404, 0.999
        %v917 = vadd.f32 %v405, 0.999
        %v918 = vadd.f32 %v406, 0.999
        %v919 = vadd.f32 %v407, 0.999
        %v920 = vadd.f32 %v408, 0.999
        %v921 = vadd.f32 %v409, 0.999
        %v922 = vadd.f32 %v410, 0.999
        %v923 = vadd.f32 %v411, 0.999
        %v924 = vadd.f32 %v412, 0.999
        %v925 = vadd.f32 %v413, 0.999
        %v926 = vadd.f32 %v414, 0.999
        %v927 = vadd.f32 %v415, 0.999
        %v928 = vadd.f32 %v416, 0.999
        %v929 = vadd.f32 %v417, 0.999
        %v930 = vadd.f32 %v418, 0.999
        %v931 = vadd.f32 %v419, 0.999
        %v932 = vadd.f32 %v420, 0.999
        %v933 = vadd.f32 %v421, 0.999
        %v934 = vadd.f32 %v422, 0.999
        %v935 = vadd.f32 %v423, 0.999
        %v936 = vadd.f32 %v424, 0.999
        %v937 = vadd.f32 %v425, 0.999
        %v938 = vadd.f32 %v426, 0.999
        %v939 = vadd.f32 %v427, 0.999
        %v940 = vadd.f32 %v428, 0.999
        %v941 = vadd.f32 %v429, 0.999
        %v942 = vadd.f32 %v430, 0.999
        %v943 = vadd.f32 %v431, 0.999
        %v944 = vadd.f32 %v432, 0.999
        %v945 = vadd.f32 %v433, 0.999
        %v946 = vadd.f32 %v434, 0.999
        %v947 = vadd.f32 %v435, 0.999
        %v948 = vadd.f32 %v436, 0.999
        %v949 = vadd.f32 %v437, 0.999
        %v950 = vadd.f32 %v438, 0.999
        %v951 = vadd.f32 %v439, 0.999
        %v952 = vadd.f32 %v440, 0.999
        %v953 = vadd.f32 %v441, 0.999
        %v954 = vadd.f32 %v442, 0.999
        %v955 = vadd.f32 %v443, 0.999
        %v956 = vadd.f32 %v444, 0.999
        %v957 = vadd.f32 %v445, 0.999
        %v958 = vadd.f32 %v446, 0.999
        %v959 = vadd.f32 %v447, 0.999
        %v960 = vadd.f32 %v448, 0.999
        %v961 = vadd.f32 %v449, 0.999
        %v962 = vadd.f32 %v450, 0.999
        %v963 = vadd.f32 %v451, 0.999
        %v964 = vadd.f32 %v452, 0.999
        %v965 = vadd.f32 %v453, 0.999
        %v966 = vadd.f32 %v454, 0.999
        %v967 = vadd.f32 %v455, 0.999
        %v968 = vadd.f32 %v456, 0.999
        %v969 = vadd.f32 %v457, 0.999
        %v970 = vadd.f32 %v458, 0.999
        %v971 = vadd.f32 %v459, 0.999
        %v972 = vadd.f32 %v460, 0.999
        %v973 = vadd.f32 %v461, 0.999
        %v974 = vadd.f32 %v462, 0.999
        %v975 = vadd.f32 %v463, 0.999
        %v976 = vadd.f32 %v464, 0.999
        %v977 = vadd.f32 %v465, 0.999
        %v978 = vadd.f32 %v466, 0.999
        %v979 = vadd.f32 %v467, 0.999
        %v980 = vadd.f32 %v468, 0.999
        %v981 = vadd.f32 %v469, 0.999
        %v982 = vadd.f32 %v470, 0.999
        %v983 = vadd.f32 %v471, 0.999
        %v984 = vadd.f32 %v472, 0.999
        %v985 = vadd.f32 %v473, 0.999
        %v986 = vadd.f32 %v474, 0.999
        %v987 = vadd.f32 %v475, 0.999
        %v988 = vadd.f32 %v476, 0.999
        %v989 = vadd.f32 %v477, 0.999
        %v990 = vadd.f32 %v478, 0.999
        %v991 = vadd.f32 %v479, 0.999
        %v992 = vadd.f32 %v480, 0.999
        %v993 = vadd.f32 %v481, 0.999
        %v994 = vadd.f32 %v482, 0.999
        %v995 = vadd.f32 %v483, 0.999
        %v996 = vadd.f32 %v484, 0.999
        %v997 = vadd.f32 %v485, 0.999
        %v998 = vadd.f32 %v486, 0.999
        %v999 = vadd.f32 %v487, 0.999
        %v1000 = vadd.f32 %v488, 0.999
        %v1001 = vadd.f32 %v489, 0.999
        %v1002 = vadd.f32 %v490, 0.999
        %v1003 = vadd.f32 %v491, 0.999
        %v1004 = vadd.f32 %v492, 0.999
        %v1005 = vadd.f32 %v493, 0.999
        %v1006 = vadd.f32 %v494, 0.999
        %v1007 = vadd.f32 %v495, 0.999
        %v1008 = vadd.f32 %v496, 0.999
        %v1009 = vadd.f32 %v497, 0.999
        %v1010 = vadd.f32 %v498, 0.999
        %v1011 = vadd.f32 %v499, 0.999
        %v1012 = vadd.f32 %v500, 0.999
        %v1013 = vadd.f32 %v501, 0.999
        %v1014 = vadd.f32 %v502, 0.999
        %v1015 = vadd.f32 %v503, 0.999
        %v1016 = vadd.f32 %v504, 0.999
        %v1017 = vadd.f32 %v505, 0.999
        %v1018 = vadd.f32 %v506, 0.999
        %v1019 = vadd.f32 %v507, 0.999
        %v1020 = vadd.f32 %v508, 0.999
        %v1021 = vadd.f32 %v509, 0.999
        %v1022 = vadd.f32 %v510, 0.999
        %v1023 = vadd.f32 %v511, 0.999
        %v1024 = vadd.f32 %v512, 0.999
        %v1025 = vadd.f32 %v513, 0.999
        %v1026 = vadd.f32 %v514, 0.999
        %v1027 = vadd.f32 %v515, 0.999
        %v1028 = vadd.f32 %v516, 0.999
        %v1029 = vadd.f32 %v517, 0.999
        %v1030 = vadd.f32 %v518, 0.999
        %v1031 = vadd.f32 %v519, 0.999
        %v1032 = vadd.f32 %v520, 0.999
        %v1033 = vadd.f32 %v521, 0.999
        %v1034 = vadd.f32 %v522, 0.999
        %v1035 = vadd.f32 %v523, 0.999
        %v1036 = vadd.f32 %v524, 0.999
        %v1037 = vadd.f32 %v525, 0.999
        %v1038 = vadd.f32 %v526, 0.999
        %v1039 = vadd.f32 %v527, 0.999
        %v1040 = vadd.f32 %v528, 0.999
        %v1041 = vadd.f32 %v529, 0.999
        %v1042 = vadd.f32 %v530, 0.999
        %v1043 = vadd.f32 %v531, 0.999
        %v1044 = vadd.f32 %v532, 0.999
        %v1045 = vadd.f32 %v533, 0.999
        %v1046 = vadd.f32 %v534, 0.999
        %v1047 = vadd.f32 %v535, 0.999
        %v1048 = vadd.f32 %v536, 0.999
        %v1049 = vadd.f32 %v537, 0.999
        %v1050 = vadd.f32 %v538, 0.999
        %v1051 = vadd.f32 %v539, 0.999
        %v1052 = vadd.f32 %v540, 0.999
        %v1053 = vadd.f32 %v541, 0.999
        %v1054 = vadd.f32 %v542, 0.999
        %v1055 = vadd.f32 %v543, 0.999
        %v1056 = vadd.f32 %v544, 0.999
        %v1057 = vadd.f32 %v545, 0.999
        %v1058 = vadd.f32 %v546, 0.999
        %v1059 = vadd.f32 %v547, 0.999
        %v1060 = vadd.f32 %v548, 0.999
        %v1061 = vadd.f32 %v549, 0.999
        %v1062 = vadd.f32 %v550, 0.999
        %v1063 = vadd.f32 %v551, 0.999
        %v1064 = vadd.f32 %v552, 0.999
        %v1065 = vadd.f32 %v553, 0.999
        %v1066 = vadd.f32 %v554, 0.999
        %v1067 = vadd.f32 %v555, 0.999
        %v1068 = vadd.f32 %v556, 0.999
        %v1069 = vadd.f32 %v557, 0.999
        %v1070 = vadd.f32 %v558, 0.999
        %v1071 = vadd.f32 %v559, 0.999
        %v1072 = vadd.f32 %v560, 0.999
        %v1073 = vadd.f32 %v561, 0.999
        %v1074 = vadd.f32 %v562, 0.999
        %v1075 = vadd.f32 %v563, 0.999
        %v1076 = vadd.f32 %v564, 0.999
        %v1077 = vadd.f32 %v565, 0.999
        %v1078 = vadd.f32 %v566, 0.999
        %v1079 = vadd.f32 %v567, 0.999
        %v1080 = vadd.f32 %v568, 0.999
        %v1081 = vadd.f32 %v569, 0.999
        %v1082 = vadd.f32 %v570, 0.999
        %v1083 = vadd.f32 %v571, 0.999
        %v1084 = vadd.f32 %v572, 0.999
        %v1085 = vadd.f32 %v573, 0.999
        %v1086 = vadd.f32 %v574, 0.999
        %v1087 = vadd.f32 %v575, 0.999
        %v1088 = vadd.f32 %v576, 0.999
        %v1089 = vadd.f32 %v577, 0.999
        %v1090 = vadd.f32 %v578, 0.999
        %v1091 = vadd.f32 %v579, 0.999
        %v1092 = vadd.f32 %v580, 0.999
        %v1093 = vadd.f32 %v581, 0.999
        %v1094 = vadd.f32 %v582, 0.999
        %v1095 = vadd.f32 %v583, 0.999
        %v1096 = vadd.f32 %v584, 0.999
        %v1097 = vadd.f32 %v585, 0.999
        %v1098 = vadd.f32 %v586, 0.999
        %v1099 = vadd.f32 %v587, 0.999
        %v1100 = vadd.f32 %v588, 0.999
        %v1101 = vadd.f32 %v589, 0.999
        %v1102 = vadd.f32 %v590, 0.999
        %v1103 = vadd.f32 %v591, 0.999
        %v1104 = vadd.f32 %v592, 0.999
        %v1105 = vadd.f32 %v593, 0.999
        %v1106 = vadd.f32 %v594, 0.999
        %v1107 = vadd.f32 %v595, 0.999
        %v1108 = vadd.f32 %v596, 0.999
        %v1109 = vadd.f32 %v597, 0.999
        %v1110 = vadd.f32 %v598, 0.999
        %v1111 = vadd.f32 %v599, 0.999
        %v1112 = vadd.f32 %v600, 0.999
        %v1113 = vadd.f32 %v601, 0.999
        %v1114 = vadd.f32 %v602, 0.999
        %v1115 = vadd.f32 %v603, 0.999
        %v1116 = vadd.f32 %v604, 0.999
        %v1117 = vadd.f32 %v605, 0.999
        %v1118 = vadd.f32 %v606, 0.999
        %v1119 = vadd.f32 %v607, 0.999
        %v1120 = vadd.f32 %v608, 0.999
        %v1121 = vadd.f32 %v609, 0.999
        %v1122 = vadd.f32 %v610, 0.999
        %v1123 = vadd.f32 %v611, 0.999
        %v1124 = vadd.f32 %v612, 0.999
        %v1125 = vadd.f32 %v613, 0.999
        %v1126 = vadd.f32 %v614, 0.999
        %v1127 = vadd.f32 %v615, 0.999
        %v1128 = vadd.f32 %v616, 0.999
        %v1129 = vadd.f32 %v617, 0.999
        %v1130 = vadd.f32 %v618, 0.999
        %v1131 = vadd.f32 %v619, 0.999
        %v1132 = vadd.f32 %v620, 0.999
        %v1133 = vadd.f32 %v621, 0.999
        %v1134 = vadd.f32 %v622, 0.999
        %v1135 = vadd.f32 %v623, 0.999
        %v1136 = vadd.f32 %v624, 0.999
        %v1137 = vadd.f32 %v625, 0.999
        %v1138 = vadd.f32 %v626, 0.999
        %v1139 = vadd.f32 %v627, 0.999
        %v1140 = vadd.f32 %v628, 0.999
        %v1141 = vadd.f32 %v629, 0.999
        %v1142 = vadd.f32 %v630, 0.999
        %v1143 = vadd.f32 %v631, 0.999
        %v1144 = vadd.f32 %v632, 0.999
        %v1145 = vadd.f32 %v633, 0.999
        %v1146 = vadd.f32 %v634, 0.999
        %v1147 = vadd.f32 %v635, 0.999
        %v1148 = vadd.f32 %v636, 0.999
        %v1149 = vadd.f32 %v637, 0.999
        %v1150 = vadd.f32 %v638, 0.999
        %v1151 = vadd.f32 %v639, 0.999
        %v1152 = vadd.f32 %v640, 0.999
        %v1153 = vadd.f32 %v641, 0.999
        %v1154 = vadd.f32 %v642, 0.999
        %v1155 = vadd.f32 %v643, 0.999
        %v1156 = vadd.f32 %v644, 0.999
        %v1157 = vadd.f32 %v645, 0.999
        %v1158 = vadd.f32 %v646, 0.999
        %v1159 = vadd.f32 %v647, 0.999
        %v1160 = vadd.f32 %v648, 0.999
        %v1161 = vadd.f32 %v649, 0.999
        %v1162 = vand.u32 2147483647, %v650
        %v1163 = vand.u32 2147483647, %v651
        %v1164 = vand.u32 2147483647, %v652
        %v1165 = vand.u32 2147483647, %v653
        %v1166 = vand.u32 2147483647, %v654
        %v1167 = vand.u32 2147483647, %v655
        %v1168 = vand.u32 2147483647, %v656
        %v1169 = vand.u32 2147483647, %v657
        %v1170 = vand.u32 2147483647, %v658
        %v1171 = vand.u32 2147483647, %v659
        %v1172 = vand.u32 2147483647, %v660
        %v1173 = vand.u32 2147483647, %v661
        %v1174 = vand.u32 2147483647, %v662
        %v1175 = vand.u32 2147483647, %v663
        %v1176 = vand.u32 2147483647, %v664
        %v1177 = vand.u32 2147483647, %v665
        %v1178 = vand.u32 2147483647, %v666
        %v1179 = vand.u32 2147483647, %v667
        %v1180 = vand.u32 2147483647, %v668
        %v1181 = vand.u32 2147483647, %v669
        %v1182 = vand.u32 2147483647, %v670
        %v1183 = vand.u32 2147483647, %v671
        %v1184 = vand.u32 2147483647, %v672
        %v1185 = vand.u32 2147483647, %v673
        %v1186 = vand.u32 2147483647, %v674
        %v1187 = vand.u32 2147483647, %v675
        %v1188 = vand.u32 2147483647, %v676
        %v1189 = vand.u32 2147483647, %v677
        %v1190 = vand.u32 2147483647, %v678
        %v1191 = vand.u32 2147483647, %v679
        %v1192 = vand.u32 2147483647, %v680
        %v1193 = vand.u32 2147483647, %v681
        %v1194 = vand.u32 2147483647, %v682
        %v1195 = vand.u32 2147483647, %v683
        %v1196 = vand.u32 2147483647, %v684
        %v1197 = vand.u32 2147483647, %v685
        %v1198 = vand.u32 2147483647, %v686
        %v1199 = vand.u32 2147483647, %v687
        %v1200 = vand.u32 2147483647, %v688
        %v1201 = vand.u32 2147483647, %v689
        %v1202 = vand.u32 2147483647, %v690
        %v1203 = vand.u32 2147483647, %v691
        %v1204 = vand.u32 2147483647, %v692
        %v1205 = vand.u32 2147483647, %v693
        %v1206 = vand.u32 2147483647, %v694
        %v1207 = vand.u32 2147483647, %v695
        %v1208 = vand.u32 2147483647, %v696
        %v1209 = vand.u32 2147483647, %v697
        %v1210 = vand.u32 2147483647, %v698
        %v1211 = vand.u32 2147483647, %v699
        %v1212 = vand.u32 2147483647, %v700
        %v1213 = vand.u32 2147483647, %v701
        %v1214 = vand.u32 2147483647, %v702
        %v1215 = vand.u32 2147483647, %v703
        %v1216 = vand.u32 2147483647, %v704
        %v1217 = vand.u32 2147483647, %v705
        %v1218 = vand.u32 2147483647, %v706
        %v1219 = vand.u32 2147483647, %v707
        %v1220 = vand.u32 2147483647, %v708
        %v1221 = vand.u32 2147483647, %v709
        %v1222 = vand.u32 2147483647, %v710
        %v1223 = vand.u32 2147483647, %v711
        %v1224 = vand.u32 2147483647, %v712
        %v1225 = vand.u32 2147483647, %v713
        %v1226 = vand.u32 2147483647, %v714
        %v1227 = vand.u32 2147483647, %v715
        %v1228 = vand.u32 2147483647, %v716
        %v1229 = vand.u32 2147483647, %v717
        %v1230 = vand.u32 2147483647, %v718
        %v1231 = vand.u32 2147483647, %v719
        %v1232 = vand.u32 2147483647, %v720
        %v1233 = vand.u32 2147483647, %v721
        %v1234 = vand.u32 2147483647, %v722
        %v1235 = vand.u32 2147483647, %v723
        %v1236 = vand.u32 2147483647, %v724
        %v1237 = vand.u32 2147483647, %v725
        %v1238 = vand.u32 2147483647, %v726
        %v1239 = vand.u32 2147483647, %v727
        %v1240 = vand.u32 2147483647, %v728
        %v1241 = vand.u32 2147483647, %v729
        %v1242 = vand.u32 2147483647, %v730
        %v1243 = vand.u32 2147483647, %v731
        %v1244 = vand.u32 2147483647, %v732
        %v1245 = vand.u32 2147483647, %v733
        %v1246 = vand.u32 2147483647, %v734
        %v1247 = vand.u32 2147483647, %v735
        %v1248 = vand.u32 2147483647, %v736
        %v1249 = vand.u32 2147483647, %v737
        %v1250 = vand.u32 2147483647, %v738
        %v1251 = vand.u32 2147483647, %v739
        %v1252 = vand.u32 2147483647, %v740
        %v1253 = vand.u32 2147483647, %v741
        %v1254 = vand.u32 2147483647, %v742
        %v1255 = vand.u32 2147483647, %v743
        %v1256 = vand.u32 2147483647, %v744
        %v1257 = vand.u32 2147483647, %v745
        %v1258 = vand.u32 2147483647, %v746
        %v1259 = vand.u32 2147483647, %v747
        %v1260 = vand.u32 2147483647, %v748
        %v1261 = vand.u32 2147483647, %v749
        %v1262 = vand.u32 2147483647, %v750
        %v1263 = vand.u32 2147483647, %v751
        %v1264 = vand.u32 2147483647, %v752
        %v1265 = vand.u32 2147483647, %v753
        %v1266 = vand.u32 2147483647, %v754
        %v1267 = vand.u32 2147483647, %v755
        %v1268 = vand.u32 2147483647, %v756
        %v1269 = vand.u32 2147483647, %v757
        %v1270 = vand.u32 2147483647, %v758
        %v1271 = vand.u32 2147483647, %v759
        %v1272 = vand.u32 2147483647, %v760
        %v1273 = vand.u32 2147483647, %v761
        %v1274 = vand.u32 2147483647, %v762
        %v1275 = vand.u32 2147483647, %v763
        %v1276 = vand.u32 2147483647, %v764
        %v1277 = vand.u32 2147483647, %v765
        %v1278 = vand.u32 2147483647, %v766
        %v1279 = vand.u32 2147483647, %v767
        %v1280 = vand.u32 2147483647, %v768
        %v1281 = vand.u32 2147483647, %v769
        %v1282 = vand.u32 2147483647, %v770
        %v1283 = vand.u32 2147483647, %v771
        %v1284 = vand.u32 2147483647, %v772
        %v1285 = vand.u32 2147483647, %v773
        %v1286 = vand.u32 2147483647, %v774
        %v1287 = vand.u32 2147483647, %v775
        %v1288 = vand.u32 2147483647, %v776
        %v1289 = vand.u32 2147483647, %v777
        %v1290 = vand.u32 2147483647, %v778
        %v1291 = vand.u32 2147483647, %v779
        %v1292 = vand.u32 2147483647, %v780
        %v1293 = vand.u32 2147483647, %v781
        %v1294 = vand.u32 2147483647, %v782
        %v1295 = vand.u32 2147483647, %v783
        %v1296 = vand.u32 2147483647, %v784
        %v1297 = vand.u32 2147483647, %v785
        %v1298 = vand.u32 2147483647, %v786
        %v1299 = vand.u32 2147483647, %v787
        %v1300 = vand.u32 2147483647, %v788
        %v1301 = vand.u32 2147483647, %v789
        %v1302 = vand.u32 2147483647, %v790
        %v1303 = vand.u32 2147483647, %v791
        %v1304 = vand.u32 2147483647, %v792
        %v1305 = vand.u32 2147483647, %v793
        %v1306 = vand.u32 2147483647, %v794
        %v1307 = vand.u32 2147483647, %v795
        %v1308 = vand.u32 2147483647, %v796
        %v1309 = vand.u32 2147483647, %v797
        %v1310 = vand.u32 2147483647, %v798
        %v1311 = vand.u32 2147483647, %v799
        %v1312 = vand.u32 2147483647, %v800
        %v1313 = vand.u32 2147483647, %v801
        %v1314 = vand.u32 2147483647, %v802
        %v1315 = vand.u32 2147483647, %v803
        %v1316 = vand.u32 2147483647, %v804
        %v1317 = vand.u32 2147483647, %v805
        %v1318 = vand.u32 2147483647, %v806
        %v1319 = vand.u32 2147483647, %v807
        %v1320 = vand.u32 2147483647, %v808
        %v1321 = vand.u32 2147483647, %v809
        %v1322 = vand.u32 2147483647, %v810
        %v1323 = vand.u32 2147483647, %v811
        %v1324 = vand.u32 2147483647, %v812
        %v1325 = vand.u32 2147483647, %v813
        %v1326 = vand.u32 2147483647, %v814
        %v1327 = vand.u32 2147483647, %v815
        %v1328 = vand.u32 2147483647, %v816
        %v1329 = vand.u32 2147483647, %v817
        %v1330 = vand.u32 2147483647, %v818
        %v1331 = vand.u32 2147483647, %v819
        %v1332 = vand.u32 2147483647, %v820
        %v1333 = vand.u32 2147483647, %v821
        %v1334 = vand.u32 2147483647, %v822
        %v1335 = vand.u32 2147483647, %v823
        %v1336 = vand.u32 2147483647, %v824
        %v1337 = vand.u32 2147483647, %v825
        %v1338 = vand.u32 2147483647, %v826
        %v1339 = vand.u32 2147483647, %v827
        %v1340 = vand.u32 2147483647, %v828
        %v1341 = vand.u32 2147483647, %v829
        %v1342 = vand.u32 2147483647, %v830
        %v1343 = vand.u32 2147483647, %v831
        %v1344 = vand.u32 2147483647, %v832
        %v1345 = vand.u32 2147483647, %v833
        %v1346 = vand.u32 2147483647, %v834
        %v1347 = vand.u32 2147483647, %v835
        %v1348 = vand.u32 2147483647, %v836
        %v1349 = vand.u32 2147483647, %v837
        %v1350 = vand.u32 2147483647, %v838
        %v1351 = vand.u32 2147483647, %v839
        %v1352 = vand.u32 2147483647, %v840
        %v1353 = vand.u32 2147483647, %v841
        %v1354 = vand.u32 2147483647, %v842
        %v1355 = vand.u32 2147483647, %v843
        %v1356 = vand.u32 2147483647, %v844
        %v1357 = vand.u32 2147483647, %v845
        %v1358 = vand.u32 2147483647, %v846
        %v1359 = vand.u32 2147483647, %v847
        %v1360 = vand.u32 2147483647, %v848
        %v1361 = vand.u32 2147483647, %v849
        %v1362 = vand.u32 2147483647, %v850
        %v1363 = vand.u32 2147483647, %v851
        %v1364 = vand.u32 2147483647, %v852
        %v1365 = vand.u32 2147483647, %v853
        %v1366 = vand.u32 2147483647, %v854
        %v1367 = vand.u32 2147483647, %v855
        %v1368 = vand.u32 2147483647, %v856
        %v1369 = vand.u32 2147483647, %v857
        %v1370 = vand.u32 2147483647, %v858
        %v1371 = vand.u32 2147483647, %v859
        %v1372 = vand.u32 2147483647, %v860
        %v1373 = vand.u32 2147483647, %v861
        %v1374 = vand.u32 2147483647, %v862
        %v1375 = vand.u32 2147483647, %v863
        %v1376 = vand.u32 2147483647, %v864
        %v1377 = vand.u32 2147483647, %v865
        %v1378 = vand.u32 2147483647, %v866
        %v1379 = vand.u32 2147483647, %v867
        %v1380 = vand.u32 2147483647, %v868
        %v1381 = vand.u32 2147483647, %v869
        %v1382 = vand.u32 2147483647, %v870
        %v1383 = vand.u32 2147483647, %v871
        %v1384 = vand.u32 2147483647, %v872
        %v1385 = vand.u32 2147483647, %v873
        %v1386 = vand.u32 2147483647, %v874
        %v1387 = vand.u32 2147483647, %v875
        %v1388 = vand.u32 2147483647, %v876
        %v1389 = vand.u32 2147483647, %v877
        %v1390 = vand.u32 2147483647, %v878
        %v1391 = vand.u32 2147483647, %v879
        %v1392 = vand.u32 2147483647, %v880
        %v1393 = vand.u32 2147483647, %v881
        %v1394 = vand.u32 2147483647, %v882
        %v1395 = vand.u32 2147483647, %v883
        %v1396 = vand.u32 2147483647, %v884
        %v1397 = vand.u32 2147483647, %v885
        %v1398 = vand.u32 2147483647, %v886
        %v1399 = vand.u32 2147483647, %v887
        %v1400 = vand.u32 2147483647, %v888
        %v1401 = vand.u32 2147483647, %v889
        %v1402 = vand.u32 2147483647, %v890
        %v1403 = vand.u32 2147483647, %v891
        %v1404 = vand.u32 2147483647, %v892
        %v1405 = vand.u32 2147483647, %v893
        %v1406 = vand.u32 2147483647, %v894
        %v1407 = vand.u32 2147483647, %v895
        %v1408 = vand.u32 2147483647, %v896
        %v1409 = vand.u32 2147483647, %v897
        %v1410 = vand.u32 2147483647, %v898
        %v1411 = vand.u32 2147483647, %v899
        %v1412 = vand.u32 2147483647, %v900
        %v1413 = vand.u32 2147483647, %v901
        %v1414 = vand.u32 2147483647, %v902
        %v1415 = vand.u32 2147483647, %v903
        %v1416 = vand.u32 2147483647, %v904
        %v1417 = vand.u32 2147483647, %v905
        %v1418 = vand.u32 2147483647, %v906
        %v1419 = vand.u32 2147483647, %v907
        %v1420 = vand.u32 2147483647, %v908
        %v1421 = vand.u32 2147483647, %v909
        %v1422 = vand.u32 2147483647, %v910
        %v1423 = vand.u32 2147483647, %v911
        %v1424 = vand.u32 2147483647, %v912
        %v1425 = vand.u32 2147483647, %v913
        %v1426 = vand.u32 2147483647, %v914
        %v1427 = vand.u32 2147483647, %v915
        %v1428 = vand.u32 2147483647, %v916
        %v1429 = vand.u32 2147483647, %v917
        %v1430 = vand.u32 2147483647, %v918
        %v1431 = vand.u32 2147483647, %v919
        %v1432 = vand.u32 2147483647, %v920
        %v1433 = vand.u32 2147483647, %v921
        %v1434 = vand.u32 2147483647, %v922
        %v1435 = vand.u32 2147483647, %v923
        %v1436 = vand.u32 2147483647, %v924
        %v1437 = vand.u32 2147483647, %v925
        %v1438 = vand.u32 2147483647, %v926
        %v1439 = vand.u32 2147483647, %v927
        %v1440 = vand.u32 2147483647, %v928
        %v1441 = vand.u32 2147483647, %v929
        %v1442 = vand.u32 2147483647, %v930
        %v1443 = vand.u32 2147483647, %v931
        %v1444 = vand.u32 2147483647, %v932
        %v1445 = vand.u32 2147483647, %v933
        %v1446 = vand.u32 2147483647, %v934
        %v1447 = vand.u32 2147483647, %v935
        %v1448 = vand.u32 2147483647, %v936
        %v1449 = vand.u32 2147483647, %v937
        %v1450 = vand.u32 2147483647, %v938
        %v1451 = vand.u32 2147483647, %v939
        %v1452 = vand.u32 2147483647, %v940
        %v1453 = vand.u32 2147483647, %v941
        %v1454 = vand.u32 2147483647, %v942
        %v1455 = vand.u32 2147483647, %v943
        %v1456 = vand.u32 2147483647, %v944
        %v1457 = vand.u32 2147483647, %v945
        %v1458 = vand.u32 2147483647, %v946
        %v1459 = vand.u32 2147483647, %v947
        %v1460 = vand.u32 2147483647, %v948
        %v1461 = vand.u32 2147483647, %v949
        %v1462 = vand.u32 2147483647, %v950
        %v1463 = vand.u32 2147483647, %v951
        %v1464 = vand.u32 2147483647, %v952
        %v1465 = vand.u32 2147483647, %v953
        %v1466 = vand.u32 2147483647, %v954
        %v1467 = vand.u32 2147483647, %v955
        %v1468 = vand.u32 2147483647, %v956
        %v1469 = vand.u32 2147483647, %v957
        %v1470 = vand.u32 2147483647, %v958
        %v1471 = vand.u32 2147483647, %v959
        %v1472 = vand.u32 2147483647, %v960
        %v1473 = vand.u32 2147483647, %v961
        %v1474 = vand.u32 2147483647, %v962
        %v1475 = vand.u32 2147483647, %v963
        %v1476 = vand.u32 2147483647, %v964
        %v1477 = vand.u32 2147483647, %v965
        %v1478 = vand.u32 2147483647, %v966
        %v1479 = vand.u32 2147483647, %v967
        %v1480 = vand.u32 2147483647, %v968
        %v1481 = vand.u32 2147483647, %v969
        %v1482 = vand.u32 2147483647, %v970
        %v1483 = vand.u32 2147483647, %v971
        %v1484 = vand.u32 2147483647, %v972
        %v1485 = vand.u32 2147483647, %v973
        %v1486 = vand.u32 2147483647, %v974
        %v1487 = vand.u32 2147483647, %v975
        %v1488 = vand.u32 2147483647, %v976
        %v1489 = vand.u32 2147483647, %v977
        %v1490 = vand.u32 2147483647, %v978
        %v1491 = vand.u32 2147483647, %v979
        %v1492 = vand.u32 2147483647, %v980
        %v1493 = vand.u32 2147483647, %v981
        %v1494 = vand.u32 2147483647, %v982
        %v1495 = vand.u32 2147483647, %v983
        %v1496 = vand.u32 2147483647, %v984
        %v1497 = vand.u32 2147483647, %v985
        %v1498 = vand.u32 2147483647, %v986
        %v1499 = vand.u32 2147483647, %v987
        %v1500 = vand.u32 2147483647, %v988
        %v1501 = vand.u32 2147483647, %v989
        %v1502 = vand.u32 2147483647, %v990
        %v1503 = vand.u32 2147483647, %v991
        %v1504 = vand.u32 2147483647, %v992
        %v1505 = vand.u32 2147483647, %v993
        %v1506 = vand.u32 2147483647, %v994
        %v1507 = vand.u32 2147483647, %v995
        %v1508 = vand.u32 2147483647, %v996
        %v1509 = vand.u32 2147483647, %v997
        %v1510 = vand.u32 2147483647, %v998
        %v1511 = vand.u32 2147483647, %v999
        %v1512 = vand.u32 2147483647, %v1000
        %v1513 = vand.u32 2147483647, %v1001
        %v1514 = vand.u32 2147483647, %v1002
        %v1515 = vand.u32 2147483647, %v1003
        %v1516 = vand.u32 2147483647, %v1004
        %v1517 = vand.u32 2147483647, %v1005
        %v1518 = vand.u32 2147483647, %v1006
        %v1519 = vand.u32 2147483647, %v1007
        %v1520 = vand.u32 2147483647, %v1008
        %v1521 = vand.u32 2147483647, %v1009
        %v1522 = vand.u32 2147483647, %v1010
        %v1523 = vand.u32 2147483647, %v1011
        %v1524 = vand.u32 2147483647, %v1012
        %v1525 = vand.u32 2147483647, %v1013
        %v1526 = vand.u32 2147483647, %v1014
        %v1527 = vand.u32 2147483647, %v1015
        %v1528 = vand.u32 2147483647, %v1016
        %v1529 = vand.u32 2147483647, %v1017
        %v1530 = vand.u32 2147483647, %v1018
        %v1531 = vand.u32 2147483647, %v1019
        %v1532 = vand.u32 2147483647, %v1020
        %v1533 = vand.u32 2147483647, %v1021
        %v1534 = vand.u32 2147483647, %v1022
        %v1535 = vand.u32 2147483647, %v1023
        %v1536 = vand.u32 2147483647, %v1024
        %v1537 = vand.u32 2147483647, %v1025
        %v1538 = vand.u32 2147483647, %v1026
        %v1539 = vand.u32 2147483647, %v1027
        %v1540 = vand.u32 2147483647, %v1028
        %v1541 = vand.u32 2147483647, %v1029
        %v1542 = vand.u32 2147483647, %v1030
        %v1543 = vand.u32 2147483647, %v1031
        %v1544 = vand.u32 2147483647, %v1032
        %v1545 = vand.u32 2147483647, %v1033
        %v1546 = vand.u32 2147483647, %v1034
        %v1547 = vand.u32 2147483647, %v1035
        %v1548 = vand.u32 2147483647, %v1036
        %v1549 = vand.u32 2147483647, %v1037
        %v1550 = vand.u32 2147483647, %v1038
        %v1551 = vand.u32 2147483647, %v1039
        %v1552 = vand.u32 2147483647, %v1040
        %v1553 = vand.u32 2147483647, %v1041
        %v1554 = vand.u32 2147483647, %v1042
        %v1555 = vand.u32 2147483647, %v1043
        %v1556 = vand.u32 2147483647, %v1044
        %v1557 = vand.u32 2147483647, %v1045
        %v1558 = vand.u32 2147483647, %v1046
        %v1559 = vand.u32 2147483647, %v1047
        %v1560 = vand.u32 2147483647, %v1048
        %v1561 = vand.u32 2147483647, %v1049
        %v1562 = vand.u32 2147483647, %v1050
        %v1563 = vand.u32 2147483647, %v1051
        %v1564 = vand.u32 2147483647, %v1052
        %v1565 = vand.u32 2147483647, %v1053
        %v1566 = vand.u32 2147483647, %v1054
        %v1567 = vand.u32 2147483647, %v1055
        %v1568 = vand.u32 2147483647, %v1056
        %v1569 = vand.u32 2147483647, %v1057
        %v1570 = vand.u32 2147483647, %v1058
        %v1571 = vand.u32 2147483647, %v1059
        %v1572 = vand.u32 2147483647, %v1060
        %v1573 = vand.u32 2147483647, %v1061
        %v1574 = vand.u32 2147483647, %v1062
        %v1575 = vand.u32 2147483647, %v1063
        %v1576 = vand.u32 2147483647, %v1064
        %v1577 = vand.u32 2147483647, %v1065
        %v1578 = vand.u32 2147483647, %v1066
        %v1579 = vand.u32 2147483647, %v1067
        %v1580 = vand.u32 2147483647, %v1068
        %v1581 = vand.u32 2147483647, %v1069
        %v1582 = vand.u32 2147483647, %v1070
        %v1583 = vand.u32 2147483647, %v1071
        %v1584 = vand.u32 2147483647, %v1072
        %v1585 = vand.u32 2147483647, %v1073
        %v1586 = vand.u32 2147483647, %v1074
        %v1587 = vand.u32 2147483647, %v1075
        %v1588 = vand.u32 2147483647, %v1076
        %v1589 = vand.u32 2147483647, %v1077
        %v1590 = vand.u32 2147483647, %v1078
        %v1591 = vand.u32 2147483647, %v1079
        %v1592 = vand.u32 2147483647, %v1080
        %v1593 = vand.u32 2147483647, %v1081
        %v1594 = vand.u32 2147483647, %v1082
        %v1595 = vand.u32 2147483647, %v1083
        %v1596 = vand.u32 2147483647, %v1084
        %v1597 = vand.u32 2147483647, %v1085
        %v1598 = vand.u32 2147483647, %v1086
        %v1599 = vand.u32 2147483647, %v1087
        %v1600 = vand.u32 2147483647, %v1088
        %v1601 = vand.u32 2147483647, %v1089
        %v1602 = vand.u32 2147483647, %v1090
        %v1603 = vand.u32 2147483647, %v1091
        %v1604 = vand.u32 2147483647, %v1092
        %v1605 = vand.u32 2147483647, %v1093
        %v1606 = vand.u32 2147483647, %v1094
        %v1607 = vand.u32 2147483647, %v1095
        %v1608 = vand.u32 2147483647, %v1096
        %v1609 = vand.u32 2147483647, %v1097
        %v1610 = vand.u32 2147483647, %v1098
        %v1611 = vand.u32 2147483647, %v1099
        %v1612 = vand.u32 2147483647, %v1100
        %v1613 = vand.u32 2147483647, %v1101
        %v1614 = vand.u32 2147483647, %v1102
        %v1615 = vand.u32 2147483647, %v1103
        %v1616 = vand.u32 2147483647, %v1104
        %v1617 = vand.u32 2147483647, %v1105
        %v1618 = vand.u32 2147483647, %v1106
        %v1619 = vand.u32 2147483647, %v1107
        %v1620 = vand.u32 2147483647, %v1108
        %v1621 = vand.u32 2147483647, %v1109
        %v1622 = vand.u32 2147483647, %v1110
        %v1623 = vand.u32 2147483647, %v1111
        %v1624 = vand.u32 2147483647, %v1112
        %v1625 = vand.u32 2147483647, %v1113
        %v1626 = vand.u32 2147483647, %v1114
        %v1627 = vand.u32 2147483647, %v1115
        %v1628 = vand.u32 2147483647, %v1116
        %v1629 = vand.u32 2147483647, %v1117
        %v1630 = vand.u32 2147483647, %v1118
        %v1631 = vand.u32 2147483647, %v1119
        %v1632 = vand.u32 2147483647, %v1120
        %v1633 = vand.u32 2147483647, %v1121
        %v1634 = vand.u32 2147483647, %v1122
        %v1635 = vand.u32 2147483647, %v1123
        %v1636 = vand.u32 2147483647, %v1124
        %v1637 = vand.u32 2147483647, %v1125
        %v1638 = vand.u32 2147483647, %v1126
        %v1639 = vand.u32 2147483647, %v1127
        %v1640 = vand.u32 2147483647, %v1128
        %v1641 = vand.u32 2147483647, %v1129
        %v1642 = vand.u32 2147483647, %v1130
        %v1643 = vand.u32 2147483647, %v1131
        %v1644 = vand.u32 2147483647, %v1132
        %v1645 = vand.u32 2147483647, %v1133
        %v1646 = vand.u32 2147483647, %v1134
        %v1647 = vand.u32 2147483647, %v1135
        %v1648 = vand.u32 2147483647, %v1136
        %v1649 = vand.u32 2147483647, %v1137
        %v1650 = vand.u32 2147483647, %v1138
        %v1651 = vand.u32 2147483647, %v1139
        %v1652 = vand.u32 2147483647, %v1140
        %v1653 = vand.u32 2147483647, %v1141
        %v1654 = vand.u32 2147483647, %v1142
        %v1655 = vand.u32 2147483647, %v1143
        %v1656 = vand.u32 2147483647, %v1144
        %v1657 = vand.u32 2147483647, %v1145
        %v1658 = vand.u32 2147483647, %v1146
        %v1659 = vand.u32 2147483647, %v1147
        %v1660 = vand.u32 2147483647, %v1148
        %v1661 = vand.u32 2147483647, %v1149
        %v1662 = vand.u32 2147483647, %v1150
        %v1663 = vand.u32 2147483647, %v1151
        %v1664 = vand.u32 2147483647, %v1152
        %v1665 = vand.u32 2147483647, %v1153
        %v1666 = vand.u32 2147483647, %v1154
        %v1667 = vand.u32 2147483647, %v1155
        %v1668 = vand.u32 2147483647, %v1156
        %v1669 = vand.u32 2147483647, %v1157
        %v1670 = vand.u32 2147483647, %v1158
        %v1671 = vand.u32 2147483647, %v1159
        %v1672 = vand.u32 2147483647, %v1160
        %v1673 = vand.u32 2147483647, %v1161
        %v1674 = vadd.f32 %v1162, 0.001
        %v1675 = vadd.f32 %v1163, 0.001
        %v1676 = vadd.f32 %v1164, 0.001
        %v1677 = vadd.f32 %v1165, 0.001
        %v1678 = vadd.f32 %v1166, 0.001
        %v1679 = vadd.f32 %v1167, 0.001
        %v1680 = vadd.f32 %v1168, 0.001
        %v1681 = vadd.f32 %v1169, 0.001
        %v1682 = vadd.f32 %v1170, 0.001
        %v1683 = vadd.f32 %v1171, 0.001
        %v1684 = vadd.f32 %v1172, 0.001
        %v1685 = vadd.f32 %v1173, 0.001
        %v1686 = vadd.f32 %v1174, 0.001
        %v1687 = vadd.f32 %v1175, 0.001
        %v1688 = vadd.f32 %v1176, 0.001
        %v1689 = vadd.f32 %v1177, 0.001
        %v1690 = vadd.f32 %v1178, 0.001
        %v1691 = vadd.f32 %v1179, 0.001
        %v1692 = vadd.f32 %v1180, 0.001
        %v1693 = vadd.f32 %v1181, 0.001
        %v1694 = vadd.f32 %v1182, 0.001
        %v1695 = vadd.f32 %v1183, 0.001
        %v1696 = vadd.f32 %v1184, 0.001
        %v1697 = vadd.f32 %v1185, 0.001
        %v1698 = vadd.f32 %v1186, 0.001
        %v1699 = vadd.f32 %v1187, 0.001
        %v1700 = vadd.f32 %v1188, 0.001
        %v1701 = vadd.f32 %v1189, 0.001
        %v1702 = vadd.f32 %v1190, 0.001
        %v1703 = vadd.f32 %v1191, 0.001
        %v1704 = vadd.f32 %v1192, 0.001
        %v1705 = vadd.f32 %v1193, 0.001
        %v1706 = vadd.f32 %v1194, 0.001
        %v1707 = vadd.f32 %v1195, 0.001
        %v1708 = vadd.f32 %v1196, 0.001
        %v1709 = vadd.f32 %v1197, 0.001
        %v1710 = vadd.f32 %v1198, 0.001
        %v1711 = vadd.f32 %v1199, 0.001
        %v1712 = vadd.f32 %v1200, 0.001
        %v1713 = vadd.f32 %v1201, 0.001
        %v1714 = vadd.f32 %v1202, 0.001
        %v1715 = vadd.f32 %v1203, 0.001
        %v1716 = vadd.f32 %v1204, 0.001
        %v1717 = vadd.f32 %v1205, 0.001
        %v1718 = vadd.f32 %v1206, 0.001
        %v1719 = vadd.f32 %v1207, 0.001
        %v1720 = vadd.f32 %v1208, 0.001
        %v1721 = vadd.f32 %v1209, 0.001
        %v1722 = vadd.f32 %v1210, 0.001
        %v1723 = vadd.f32 %v1211, 0.001
        %v1724 = vadd.f32 %v1212, 0.001
        %v1725 = vadd.f32 %v1213, 0.001
        %v1726 = vadd.f32 %v1214, 0.001
        %v1727 = vadd.f32 %v1215, 0.001
        %v1728 = vadd.f32 %v1216, 0.001
        %v1729 = vadd.f32 %v1217, 0.001
        %v1730 = vadd.f32 %v1218, 0.001
        %v1731 = vadd.f32 %v1219, 0.001
        %v1732 = vadd.f32 %v1220, 0.001
        %v1733 = vadd.f32 %v1221, 0.001
        %v1734 = vadd.f32 %v1222, 0.001
        %v1735 = vadd.f32 %v1223, 0.001
        %v1736 = vadd.f32 %v1224, 0.001
        %v1737 = vadd.f32 %v1225, 0.001
        %v1738 = vadd.f32 %v1226, 0.001
        %v1739 = vadd.f32 %v1227, 0.001
        %v1740 = vadd.f32 %v1228, 0.001
        %v1741 = vadd.f32 %v1229, 0.001
        %v1742 = vadd.f32 %v1230, 0.001
        %v1743 = vadd.f32 %v1231, 0.001
        %v1744 = vadd.f32 %v1232, 0.001
        %v1745 = vadd.f32 %v1233, 0.001
        %v1746 = vadd.f32 %v1234, 0.001
        %v1747 = vadd.f32 %v1235, 0.001
        %v1748 = vadd.f32 %v1236, 0.001
        %v1749 = vadd.f32 %v1237, 0.001
        %v1750 = vadd.f32 %v1238, 0.001
        %v1751 = vadd.f32 %v1239, 0.001
        %v1752 = vadd.f32 %v1240, 0.001
        %v1753 = vadd.f32 %v1241, 0.001
        %v1754 = vadd.f32 %v1242, 0.001
        %v1755 = vadd.f32 %v1243, 0.001
        %v1756 = vadd.f32 %v1244, 0.001
        %v1757 = vadd.f32 %v1245, 0.001
        %v1758 = vadd.f32 %v1246, 0.001
        %v1759 = vadd.f32 %v1247, 0.001
        %v1760 = vadd.f32 %v1248, 0.001
        %v1761 = vadd.f32 %v1249, 0.001
        %v1762 = vadd.f32 %v1250, 0.001
        %v1763 = vadd.f32 %v1251, 0.001
        %v1764 = vadd.f32 %v1252, 0.001
        %v1765 = vadd.f32 %v1253, 0.001
        %v1766 = vadd.f32 %v1254, 0.001
        %v1767 = vadd.f32 %v1255, 0.001
        %v1768 = vadd.f32 %v1256, 0.001
        %v1769 = vadd.f32 %v1257, 0.001
        %v1770 = vadd.f32 %v1258, 0.001
        %v1771 = vadd.f32 %v1259, 0.001
        %v1772 = vadd.f32 %v1260, 0.001
        %v1773 = vadd.f32 %v1261, 0.001
        %v1774 = vadd.f32 %v1262, 0.001
        %v1775 = vadd.f32 %v1263, 0.001
        %v1776 = vadd.f32 %v1264, 0.001
        %v1777 = vadd.f32 %v1265, 0.001
        %v1778 = vadd.f32 %v1266, 0.001
        %v1779 = vadd.f32 %v1267, 0.001
        %v1780 = vadd.f32 %v1268, 0.001
        %v1781 = vadd.f32 %v1269, 0.001
        %v1782 = vadd.f32 %v1270, 0.001
        %v1783 = vadd.f32 %v1271, 0.001
        %v1784 = vadd.f32 %v1272, 0.001
        %v1785 = vadd.f32 %v1273, 0.001
        %v1786 = vadd.f32 %v1274, 0.001
        %v1787 = vadd.f32 %v1275, 0.001
        %v1788 = vadd.f32 %v1276, 0.001
        %v1789 = vadd.f32 %v1277, 0.001
        %v1790 = vadd.f32 %v1278, 0.001
        %v1791 = vadd.f32 %v1279, 0.001
        %v1792 = vadd.f32 %v1280, 0.001
        %v1793 = vadd.f32 %v1281, 0.001
        %v1794 = vadd.f32 %v1282, 0.001
        %v1795 = vadd.f32 %v1283, 0.001
        %v1796 = vadd.f32 %v1284, 0.001
        %v1797 = vadd.f32 %v1285, 0.001
        %v1798 = vadd.f32 %v1286, 0.001
        %v1799 = vadd.f32 %v1287, 0.001
        %v1800 = vadd.f32 %v1288, 0.001
        %v1801 = vadd.f32 %v1289, 0.001
        %v1802 = vadd.f32 %v1290, 0.001
        %v1803 = vadd.f32 %v1291, 0.001
        %v1804 = vadd.f32 %v1292, 0.001
        %v1805 = vadd.f32 %v1293, 0.001
        %v1806 = vadd.f32 %v1294, 0.001
        %v1807 = vadd.f32 %v1295, 0.001
        %v1808 = vadd.f32 %v1296, 0.001
        %v1809 = vadd.f32 %v1297, 0.001
        %v1810 = vadd.f32 %v1298, 0.001
        %v1811 = vadd.f32 %v1299, 0.001
        %v1812 = vadd.f32 %v1300, 0.001
        %v1813 = vadd.f32 %v1301, 0.001
        %v1814 = vadd.f32 %v1302, 0.001
        %v1815 = vadd.f32 %v1303, 0.001
        %v1816 = vadd.f32 %v1304, 0.001
        %v1817 = vadd.f32 %v1305, 0.001
        %v1818 = vadd.f32 %v1306, 0.001
        %v1819 = vadd.f32 %v1307, 0.001
        %v1820 = vadd.f32 %v1308, 0.001
        %v1821 = vadd.f32 %v1309, 0.001
        %v1822 = vadd.f32 %v1310, 0.001
        %v1823 = vadd.f32 %v1311, 0.001
        %v1824 = vadd.f32 %v1312, 0.001
        %v1825 = vadd.f32 %v1313, 0.001
        %v1826 = vadd.f32 %v1314, 0.001
        %v1827 = vadd.f32 %v1315, 0.001
        %v1828 = vadd.f32 %v1316, 0.001
        %v1829 = vadd.f32 %v1317, 0.001
        %v1830 = vadd.f32 %v1318, 0.001
        %v1831 = vadd.f32 %v1319, 0.001
        %v1832 = vadd.f32 %v1320, 0.001
        %v1833 = vadd.f32 %v1321, 0.001
        %v1834 = vadd.f32 %v1322, 0.001
        %v1835 = vadd.f32 %v1323, 0.001
        %v1836 = vadd.f32 %v1324, 0.001
        %v1837 = vadd.f32 %v1325, 0.001
        %v1838 = vadd.f32 %v1326, 0.001
        %v1839 = vadd.f32 %v1327, 0.001
        %v1840 = vadd.f32 %v1328, 0.001
        %v1841 = vadd.f32 %v1329, 0.001
        %v1842 = vadd.f32 %v1330, 0.001
        %v1843 = vadd.f32 %v1331, 0.001
        %v1844 = vadd.f32 %v1332, 0.001
        %v1845 = vadd.f32 %v1333, 0.001
        %v1846 = vadd.f32 %v1334, 0.001
        %v1847 = vadd.f32 %v1335, 0.001
        %v1848 = vadd.f32 %v1336, 0.001
        %v1849 = vadd.f32 %v1337, 0.001
        %v1850 = vadd.f32 %v1338, 0.001
        %v1851 = vadd.f32 %v1339, 0.001
        %v1852 = vadd.f32 %v1340, 0.001
        %v1853 = vadd.f32 %v1341, 0.001
        %v1854 = vadd.f32 %v1342, 0.001
        %v1855 = vadd.f32 %v1343, 0.001
        %v1856 = vadd.f32 %v1344, 0.001
        %v1857 = vadd.f32 %v1345, 0.001
        %v1858 = vadd.f32 %v1346, 0.001
        %v1859 = vadd.f32 %v1347, 0.001
        %v1860 = vadd.f32 %v1348, 0.001
        %v1861 = vadd.f32 %v1349, 0.001
        %v1862 = vadd.f32 %v1350, 0.001
        %v1863 = vadd.f32 %v1351, 0.001
        %v1864 = vadd.f32 %v1352, 0.001
        %v1865 = vadd.f32 %v1353, 0.001
        %v1866 = vadd.f32 %v1354, 0.001
        %v1867 = vadd.f32 %v1355, 0.001
        %v1868 = vadd.f32 %v1356, 0.001
        %v1869 = vadd.f32 %v1357, 0.001
        %v1870 = vadd.f32 %v1358, 0.001
        %v1871 = vadd.f32 %v1359, 0.001
        %v1872 = vadd.f32 %v1360, 0.001
        %v1873 = vadd.f32 %v1361, 0.001
        %v1874 = vadd.f32 %v1362, 0.001
        %v1875 = vadd.f32 %v1363, 0.001
        %v1876 = vadd.f32 %v1364, 0.001
        %v1877 = vadd.f32 %v1365, 0.001
        %v1878 = vadd.f32 %v1366, 0.001
        %v1879 = vadd.f32 %v1367, 0.001
        %v1880 = vadd.f32 %v1368, 0.001
        %v1881 = vadd.f32 %v1369, 0.001
        %v1882 = vadd.f32 %v1370, 0.001
        %v1883 = vadd.f32 %v1371, 0.001
        %v1884 = vadd.f32 %v1372, 0.001
        %v1885 = vadd.f32 %v1373, 0.001
        %v1886 = vadd.f32 %v1374, 0.001
        %v1887 = vadd.f32 %v1375, 0.001
        %v1888 = vadd.f32 %v1376, 0.001
        %v1889 = vadd.f32 %v1377, 0.001
        %v1890 = vadd.f32 %v1378, 0.001
        %v1891 = vadd.f32 %v1379, 0.001
        %v1892 = vadd.f32 %v1380, 0.001
        %v1893 = vadd.f32 %v1381, 0.001
        %v1894 = vadd.f32 %v1382, 0.001
        %v1895 = vadd.f32 %v1383, 0.001
        %v1896 = vadd.f32 %v1384, 0.001
        %v1897 = vadd.f32 %v1385, 0.001
        %v1898 = vadd.f32 %v1386, 0.001
        %v1899 = vadd.f32 %v1387, 0.001
        %v1900 = vadd.f32 %v1388, 0.001
        %v1901 = vadd.f32 %v1389, 0.001
        %v1902 = vadd.f32 %v1390, 0.001
        %v1903 = vadd.f32 %v1391, 0.001
        %v1904 = vadd.f32 %v1392, 0.001
        %v1905 = vadd.f32 %v1393, 0.001
        %v1906 = vadd.f32 %v1394, 0.001
        %v1907 = vadd.f32 %v1395, 0.001
        %v1908 = vadd.f32 %v1396, 0.001
        %v1909 = vadd.f32 %v1397, 0.001
        %v1910 = vadd.f32 %v1398, 0.001
        %v1911 = vadd.f32 %v1399, 0.001
        %v1912 = vadd.f32 %v1400, 0.001
        %v1913 = vadd.f32 %v1401, 0.001
        %v1914 = vadd.f32 %v1402, 0.001
        %v1915 = vadd.f32 %v1403, 0.001
        %v1916 = vadd.f32 %v1404, 0.001
        %v1917 = vadd.f32 %v1405, 0.001
        %v1918 = vadd.f32 %v1406, 0.001
        %v1919 = vadd.f32 %v1407, 0.001
        %v1920 = vadd.f32 %v1408, 0.001
        %v1921 = vadd.f32 %v1409, 0.001
        %v1922 = vadd.f32 %v1410, 0.001
        %v1923 = vadd.f32 %v1411, 0.001
        %v1924 = vadd.f32 %v1412, 0.001
        %v1925 = vadd.f32 %v1413, 0.001
        %v1926 = vadd.f32 %v1414, 0.001
        %v1927 = vadd.f32 %v1415, 0.001
        %v1928 = vadd.f32 %v1416, 0.001
        %v1929 = vadd.f32 %v1417, 0.001
        %v1930 = vadd.f32 %v1418, 0.001
        %v1931 = vadd.f32 %v1419, 0.001
        %v1932 = vadd.f32 %v1420, 0.001
        %v1933 = vadd.f32 %v1421, 0.001
        %v1934 = vadd.f32 %v1422, 0.001
        %v1935 = vadd.f32 %v1423, 0.001
        %v1936 = vadd.f32 %v1424, 0.001
        %v1937 = vadd.f32 %v1425, 0.001
        %v1938 = vadd.f32 %v1426, 0.001
        %v1939 = vadd.f32 %v1427, 0.001
        %v1940 = vadd.f32 %v1428, 0.001
        %v1941 = vadd.f32 %v1429, 0.001
        %v1942 = vadd.f32 %v1430, 0.001
        %v1943 = vadd.f32 %v1431, 0.001
        %v1944 = vadd.f32 %v1432, 0.001
        %v1945 = vadd.f32 %v1433, 0.001
        %v1946 = vadd.f32 %v1434, 0.001
        %v1947 = vadd.f32 %v1435, 0.001
        %v1948 = vadd.f32 %v1436, 0.001
        %v1949 = vadd.f32 %v1437, 0.001
        %v1950 = vadd.f32 %v1438, 0.001
        %v1951 = vadd.f32 %v1439, 0.001
        %v1952 = vadd.f32 %v1440, 0.001
        %v1953 = vadd.f32 %v1441, 0.001
        %v1954 = vadd.f32 %v1442, 0.001
        %v1955 = vadd.f32 %v1443, 0.001
        %v1956 = vadd.f32 %v1444, 0.001
        %v1957 = vadd.f32 %v1445, 0.001
        %v1958 = vadd.f32 %v1446, 0.001
        %v1959 = vadd.f32 %v1447, 0.001
        %v1960 = vadd.f32 %v1448, 0.001
        %v1961 = vadd.f32 %v1449, 0.001
        %v1962 = vadd.f32 %v1450, 0.001
        %v1963 = vadd.f32 %v1451, 0.001
        %v1964 = vadd.f32 %v1452, 0.001
        %v1965 = vadd.f32 %v1453, 0.001
        %v1966 = vadd.f32 %v1454, 0.001
        %v1967 = vadd.f32 %v1455, 0.001
        %v1968 = vadd.f32 %v1456, 0.001
        %v1969 = vadd.f32 %v1457, 0.001
        %v1970 = vadd.f32 %v1458, 0.001
        %v1971 = vadd.f32 %v1459, 0.001
        %v1972 = vadd.f32 %v1460, 0.001
        %v1973 = vadd.f32 %v1461, 0.001
        %v1974 = vadd.f32 %v1462, 0.001
        %v1975 = vadd.f32 %v1463, 0.001
        %v1976 = vadd.f32 %v1464, 0.001
        %v1977 = vadd.f32 %v1465, 0.001
        %v1978 = vadd.f32 %v1466, 0.001
        %v1979 = vadd.f32 %v1467, 0.001
        %v1980 = vadd.f32 %v1468, 0.001
        %v1981 = vadd.f32 %v1469, 0.001
        %v1982 = vadd.f32 %v1470, 0.001
        %v1983 = vadd.f32 %v1471, 0.001
        %v1984 = vadd.f32 %v1472, 0.001
        %v1985 = vadd.f32 %v1473, 0.001
        %v1986 = vadd.f32 %v1474, 0.001
        %v1987 = vadd.f32 %v1475, 0.001
        %v1988 = vadd.f32 %v1476, 0.001
        %v1989 = vadd.f32 %v1477, 0.001
        %v1990 = vadd.f32 %v1478, 0.001
        %v1991 = vadd.f32 %v1479, 0.001
        %v1992 = vadd.f32 %v1480, 0.001
        %v1993 = vadd.f32 %v1481, 0.001
        %v1994 = vadd.f32 %v1482, 0.001
        %v1995 = vadd.f32 %v1483, 0.001
        %v1996 = vadd.f32 %v1484, 0.001
        %v1997 = vadd.f32 %v1485, 0.001
        %v1998 = vadd.f32 %v1486, 0.001
        %v1999 = vadd.f32 %v1487, 0.001
        %v2000 = vadd.f32 %v1488, 0.001
        %v2001 = vadd.f32 %v1489, 0.001
        %v2002 = vadd.f32 %v1490, 0.001
        %v2003 = vadd.f32 %v1491, 0.001
        %v2004 = vadd.f32 %v1492, 0.001
        %v2005 = vadd.f32 %v1493, 0.001
        %v2006 = vadd.f32 %v1494, 0.001
        %v2007 = vadd.f32 %v1495, 0.001
        %v2008 = vadd.f32 %v1496, 0.001
        %v2009 = vadd.f32 %v1497, 0.001
        %v2010 = vadd.f32 %v1498, 0.001
        %v2011 = vadd.f32 %v1499, 0.001
        %v2012 = vadd.f32 %v1500, 0.001
        %v2013 = vadd.f32 %v1501, 0.001
        %v2014 = vadd.f32 %v1502, 0.001
        %v2015 = vadd.f32 %v1503, 0.001
        %v2016 = vadd.f32 %v1504, 0.001
        %v2017 = vadd.f32 %v1505, 0.001
        %v2018 = vadd.f32 %v1506, 0.001
        %v2019 = vadd.f32 %v1507, 0.001
        %v2020 = vadd.f32 %v1508, 0.001
        %v2021 = vadd.f32 %v1509, 0.001
        %v2022 = vadd.f32 %v1510, 0.001
        %v2023 = vadd.f32 %v1511, 0.001
        %v2024 = vadd.f32 %v1512, 0.001
        %v2025 = vadd.f32 %v1513, 0.001
        %v2026 = vadd.f32 %v1514, 0.001
        %v2027 = vadd.f32 %v1515, 0.001
        %v2028 = vadd.f32 %v1516, 0.001
        %v2029 = vadd.f32 %v1517, 0.001
        %v2030 = vadd.f32 %v1518, 0.001
        %v2031 = vadd.f32 %v1519, 0.001
        %v2032 = vadd.f32 %v1520, 0.001
        %v2033 = vadd.f32 %v1521, 0.001
        %v2034 = vadd.f32 %v1522, 0.001
        %v2035 = vadd.f32 %v1523, 0.001
        %v2036 = vadd.f32 %v1524, 0.001
        %v2037 = vadd.f32 %v1525, 0.001
        %v2038 = vadd.f32 %v1526, 0.001
        %v2039 = vadd.f32 %v1527, 0.001
        %v2040 = vadd.f32 %v1528, 0.001
        %v2041 = vadd.f32 %v1529, 0.001
        %v2042 = vadd.f32 %v1530, 0.001
        %v2043 = vadd.f32 %v1531, 0.001
        %v2044 = vadd.f32 %v1532, 0.001
        %v2045 = vadd.f32 %v1533, 0.001
        %v2046 = vadd.f32 %v1534, 0.001
        %v2047 = vadd.f32 %v1535, 0.001
        %v2048 = vadd.f32 %v1536, 0.001
        %v2049 = vadd.f32 %v1537, 0.001
        %v2050 = vadd.f32 %v1538, 0.001
        %v2051 = vadd.f32 %v1539, 0.001
        %v2052 = vadd.f32 %v1540, 0.001
        %v2053 = vadd.f32 %v1541, 0.001
        %v2054 = vadd.f32 %v1542, 0.001
        %v2055 = vadd.f32 %v1543, 0.001
        %v2056 = vadd.f32 %v1544, 0.001
        %v2057 = vadd.f32 %v1545, 0.001
        %v2058 = vadd.f32 %v1546, 0.001
        %v2059 = vadd.f32 %v1547, 0.001
        %v2060 = vadd.f32 %v1548, 0.001
        %v2061 = vadd.f32 %v1549, 0.001
        %v2062 = vadd.f32 %v1550, 0.001
        %v2063 = vadd.f32 %v1551, 0.001
        %v2064 = vadd.f32 %v1552, 0.001
        %v2065 = vadd.f32 %v1553, 0.001
        %v2066 = vadd.f32 %v1554, 0.001
        %v2067 = vadd.f32 %v1555, 0.001
        %v2068 = vadd.f32 %v1556, 0.001
        %v2069 = vadd.f32 %v1557, 0.001
        %v2070 = vadd.f32 %v1558, 0.001
        %v2071 = vadd.f32 %v1559, 0.001
        %v2072 = vadd.f32 %v1560, 0.001
        %v2073 = vadd.f32 %v1561, 0.001
        %v2074 = vadd.f32 %v1562, 0.001
        %v2075 = vadd.f32 %v1563, 0.001
        %v2076 = vadd.f32 %v1564, 0.001
        %v2077 = vadd.f32 %v1565, 0.001
        %v2078 = vadd.f32 %v1566, 0.001
        %v2079 = vadd.f32 %v1567, 0.001
        %v2080 = vadd.f32 %v1568, 0.001
        %v2081 = vadd.f32 %v1569, 0.001
        %v2082 = vadd.f32 %v1570, 0.001
        %v2083 = vadd.f32 %v1571, 0.001
        %v2084 = vadd.f32 %v1572, 0.001
        %v2085 = vadd.f32 %v1573, 0.001
        %v2086 = vadd.f32 %v1574, 0.001
        %v2087 = vadd.f32 %v1575, 0.001
        %v2088 = vadd.f32 %v1576, 0.001
        %v2089 = vadd.f32 %v1577, 0.001
        %v2090 = vadd.f32 %v1578, 0.001
        %v2091 = vadd.f32 %v1579, 0.001
        %v2092 = vadd.f32 %v1580, 0.001
        %v2093 = vadd.f32 %v1581, 0.001
        %v2094 = vadd.f32 %v1582, 0.001
        %v2095 = vadd.f32 %v1583, 0.001
        %v2096 = vadd.f32 %v1584, 0.001
        %v2097 = vadd.f32 %v1585, 0.001
        %v2098 = vadd.f32 %v1586, 0.001
        %v2099 = vadd.f32 %v1587, 0.001
        %v2100 = vadd.f32 %v1588, 0.001
        %v2101 = vadd.f32 %v1589, 0.001
        %v2102 = vadd.f32 %v1590, 0.001
        %v2103 = vadd.f32 %v1591, 0.001
        %v2104 = vadd.f32 %v1592, 0.001
        %v2105 = vadd.f32 %v1593, 0.001
        %v2106 = vadd.f32 %v1594, 0.001
        %v2107 = vadd.f32 %v1595, 0.001
        %v2108 = vadd.f32 %v1596, 0.001
        %v2109 = vadd.f32 %v1597, 0.001
        %v2110 = vadd.f32 %v1598, 0.001
        %v2111 = vadd.f32 %v1599, 0.001
        %v2112 = vadd.f32 %v1600, 0.001
        %v2113 = vadd.f32 %v1601, 0.001
        %v2114 = vadd.f32 %v1602, 0.001
        %v2115 = vadd.f32 %v1603, 0.001
        %v2116 = vadd.f32 %v1604, 0.001
        %v2117 = vadd.f32 %v1605, 0.001
        %v2118 = vadd.f32 %v1606, 0.001
        %v2119 = vadd.f32 %v1607, 0.001
        %v2120 = vadd.f32 %v1608, 0.001
        %v2121 = vadd.f32 %v1609, 0.001
        %v2122 = vadd.f32 %v1610, 0.001
        %v2123 = vadd.f32 %v1611, 0.001
        %v2124 = vadd.f32 %v1612, 0.001
        %v2125 = vadd.f32 %v1613, 0.001
        %v2126 = vadd.f32 %v1614, 0.001
        %v2127 = vadd.f32 %v1615, 0.001
        %v2128 = vadd.f32 %v1616, 0.001
        %v2129 = vadd.f32 %v1617, 0.001
        %v2130 = vadd.f32 %v1618, 0.001
        %v2131 = vadd.f32 %v1619, 0.001
        %v2132 = vadd.f32 %v1620, 0.001
        %v2133 = vadd.f32 %v1621, 0.001
        %v2134 = vadd.f32 %v1622, 0.001
        %v2135 = vadd.f32 %v1623, 0.001
        %v2136 = vadd.f32 %v1624, 0.001
        %v2137 = vadd.f32 %v1625, 0.001
        %v2138 = vadd.f32 %v1626, 0.001
        %v2139 = vadd.f32 %v1627, 0.001
        %v2140 = vadd.f32 %v1628, 0.001
        %v2141 = vadd.f32 %v1629, 0.001
        %v2142 = vadd.f32 %v1630, 0.001
        %v2143 = vadd.f32 %v1631, 0.001
        %v2144 = vadd.f32 %v1632, 0.001
        %v2145 = vadd.f32 %v1633, 0.001
        %v2146 = vadd.f32 %v1634, 0.001
        %v2147 = vadd.f32 %v1635, 0.001
        %v2148 = vadd.f32 %v1636, 0.001
        %v2149 = vadd.f32 %v1637, 0.001
        %v2150 = vadd.f32 %v1638, 0.001
        %v2151 = vadd.f32 %v1639, 0.001
        %v2152 = vadd.f32 %v1640, 0.001
        %v2153 = vadd.f32 %v1641, 0.001
        %v2154 = vadd.f32 %v1642, 0.001
        %v2155 = vadd.f32 %v1643, 0.001
        %v2156 = vadd.f32 %v1644, 0.001
        %v2157 = vadd.f32 %v1645, 0.001
        %v2158 = vadd.f32 %v1646, 0.001
        %v2159 = vadd.f32 %v1647, 0.001
        %v2160 = vadd.f32 %v1648, 0.001
        %v2161 = vadd.f32 %v1649, 0.001
        %v2162 = vadd.f32 %v1650, 0.001
        %v2163 = vadd.f32 %v1651, 0.001
        %v2164 = vadd.f32 %v1652, 0.001
        %v2165 = vadd.f32 %v1653, 0.001
        %v2166 = vadd.f32 %v1654, 0.001
        %v2167 = vadd.f32 %v1655, 0.001
        %v2168 = vadd.f32 %v1656, 0.001
        %v2169 = vadd.f32 %v1657, 0.001
        %v2170 = vadd.f32 %v1658, 0.001
        %v2171 = vadd.f32 %v1659, 0.001
        %v2172 = vadd.f32 %v1660, 0.001
        %v2173 = vadd.f32 %v1661, 0.001
        %v2174 = vadd.f32 %v1662, 0.001
        %v2175 = vadd.f32 %v1663, 0.001
        %v2176 = vadd.f32 %v1664, 0.001
        %v2177 = vadd.f32 %v1665, 0.001
        %v2178 = vadd.f32 %v1666, 0.001
        %v2179 = vadd.f32 %v1667, 0.001
        %v2180 = vadd.f32 %v1668, 0.001
        %v2181 = vadd.f32 %v1669, 0.001
        %v2182 = vadd.f32 %v1670, 0.001
        %v2183 = vadd.f32 %v1671, 0.001
        %v2184 = vadd.f32 %v1672, 0.001
        %v2185 = vadd.f32 %v1673, 0.001
        %2186 = vst [vmem:[%s135] sm:$0xff] %v1674
        %2187 = vst [vmem:[%s135 + $0x8] sm:$0xff] %v1675
        %2188 = vst [vmem:[%s135 + $0x10] sm:$0xff] %v1676
        %2189 = vst [vmem:[%s135 + $0x18] sm:$0xff] %v1677
        %2190 = vst [vmem:[%s135 + $0x20] sm:$0xff] %v1678
        %2191 = vst [vmem:[%s135 + $0x28] sm:$0xff] %v1679
        %2192 = vst [vmem:[%s135 + $0x30] sm:$0xff] %v1680
        %2193 = vst [vmem:[%s135 + $0x38] sm:$0xff] %v1681
        %2194 = vst [vmem:[%s135 + $0x40] sm:$0xff] %v1682
        %2195 = vst [vmem:[%s135 + $0x48] sm:$0xff] %v1683
        %2196 = vst [vmem:[%s135 + $0x50] sm:$0xff] %v1684
        %2197 = vst [vmem:[%s135 + $0x58] sm:$0xff] %v1685
        %2198 = vst [vmem:[%s135 + $0x60] sm:$0xff] %v1686
        %2199 = vst [vmem:[%s135 + $0x68] sm:$0xff] %v1687
        %2200 = vst [vmem:[%s135 + $0x70] sm:$0xff] %v1688
        %2201 = vst [vmem:[%s135 + $0x78] sm:$0xff] %v1689
        %2202 = vst [vmem:[%s135 + $0x80] sm:$0xff] %v1690
        %2203 = vst [vmem:[%s135 + $0x88] sm:$0xff] %v1691
        %2204 = vst [vmem:[%s135 + $0x90] sm:$0xff] %v1692
        %2205 = vst [vmem:[%s135 + $0x98] sm:$0xff] %v1693
        %2206 = vst [vmem:[%s135 + $0xa0] sm:$0xff] %v1694
        %2207 = vst [vmem:[%s135 + $0xa8] sm:$0xff] %v1695
        %2208 = vst [vmem:[%s135 + $0xb0] sm:$0xff] %v1696
        %2209 = vst [vmem:[%s135 + $0xb8] sm:$0xff] %v1697
        %2210 = vst [vmem:[%s135 + $0xc0] sm:$0xff] %v1698
        %2211 = vst [vmem:[%s135 + $0xc8] sm:$0xff] %v1699
        %2212 = vst [vmem:[%s135 + $0xd0] sm:$0xff] %v1700
        %2213 = vst [vmem:[%s135 + $0xd8] sm:$0xff] %v1701
        %2214 = vst [vmem:[%s135 + $0xe0] sm:$0xff] %v1702
        %2215 = vst [vmem:[%s135 + $0xe8] sm:$0xff] %v1703
        %2216 = vst [vmem:[%s135 + $0xf0] sm:$0xff] %v1704
        %2217 = vst [vmem:[%s135 + $0xf8] sm:$0xff] %v1705
        %2218 = vst [vmem:[%s135 + $0x100] sm:$0xff] %v1706
        %2219 = vst [vmem:[%s135 + $0x108] sm:$0xff] %v1707
        %2220 = vst [vmem:[%s135 + $0x110] sm:$0xff] %v1708
        %2221 = vst [vmem:[%s135 + $0x118] sm:$0xff] %v1709
        %2222 = vst [vmem:[%s135 + $0x120] sm:$0xff] %v1710
        %2223 = vst [vmem:[%s135 + $0x128] sm:$0xff] %v1711
        %2224 = vst [vmem:[%s135 + $0x130] sm:$0xff] %v1712
        %2225 = vst [vmem:[%s135 + $0x138] sm:$0xff] %v1713
        %2226 = vst [vmem:[%s135 + $0x140] sm:$0xff] %v1714
        %2227 = vst [vmem:[%s135 + $0x148] sm:$0xff] %v1715
        %2228 = vst [vmem:[%s135 + $0x150] sm:$0xff] %v1716
        %2229 = vst [vmem:[%s135 + $0x158] sm:$0xff] %v1717
        %2230 = vst [vmem:[%s135 + $0x160] sm:$0xff] %v1718
        %2231 = vst [vmem:[%s135 + $0x168] sm:$0xff] %v1719
        %2232 = vst [vmem:[%s135 + $0x170] sm:$0xff] %v1720
        %2233 = vst [vmem:[%s135 + $0x178] sm:$0xff] %v1721
        %2234 = vst [vmem:[%s135 + $0x180] sm:$0xff] %v1722
        %2235 = vst [vmem:[%s135 + $0x188] sm:$0xff] %v1723
        %2236 = vst [vmem:[%s135 + $0x190] sm:$0xff] %v1724
        %2237 = vst [vmem:[%s135 + $0x198] sm:$0xff] %v1725
        %2238 = vst [vmem:[%s135 + $0x1a0] sm:$0xff] %v1726
        %2239 = vst [vmem:[%s135 + $0x1a8] sm:$0xff] %v1727
        %2240 = vst [vmem:[%s135 + $0x1b0] sm:$0xff] %v1728
        %2241 = vst [vmem:[%s135 + $0x1b8] sm:$0xff] %v1729
        %2242 = vst [vmem:[%s135 + $0x1c0] sm:$0xff] %v1730
        %2243 = vst [vmem:[%s135 + $0x1c8] sm:$0xff] %v1731
        %2244 = vst [vmem:[%s135 + $0x1d0] sm:$0xff] %v1732
        %2245 = vst [vmem:[%s135 + $0x1d8] sm:$0xff] %v1733
        %2246 = vst [vmem:[%s135 + $0x1e0] sm:$0xff] %v1734
        %2247 = vst [vmem:[%s135 + $0x1e8] sm:$0xff] %v1735
        %2248 = vst [vmem:[%s135 + $0x1f0] sm:$0xff] %v1736
        %2249 = vst [vmem:[%s135 + $0x1f8] sm:$0xff] %v1737
        %2250 = vst [vmem:[%s135 + $0x200] sm:$0xff] %v1738
        %2251 = vst [vmem:[%s135 + $0x208] sm:$0xff] %v1739
        %2252 = vst [vmem:[%s135 + $0x210] sm:$0xff] %v1740
        %2253 = vst [vmem:[%s135 + $0x218] sm:$0xff] %v1741
        %2254 = vst [vmem:[%s135 + $0x220] sm:$0xff] %v1742
        %2255 = vst [vmem:[%s135 + $0x228] sm:$0xff] %v1743
        %2256 = vst [vmem:[%s135 + $0x230] sm:$0xff] %v1744
        %2257 = vst [vmem:[%s135 + $0x238] sm:$0xff] %v1745
        %2258 = vst [vmem:[%s135 + $0x240] sm:$0xff] %v1746
        %2259 = vst [vmem:[%s135 + $0x248] sm:$0xff] %v1747
        %2260 = vst [vmem:[%s135 + $0x250] sm:$0xff] %v1748
        %2261 = vst [vmem:[%s135 + $0x258] sm:$0xff] %v1749
        %2262 = vst [vmem:[%s135 + $0x260] sm:$0xff] %v1750
        %2263 = vst [vmem:[%s135 + $0x268] sm:$0xff] %v1751
        %2264 = vst [vmem:[%s135 + $0x270] sm:$0xff] %v1752
        %2265 = vst [vmem:[%s135 + $0x278] sm:$0xff] %v1753
        %2266 = vst [vmem:[%s135 + $0x280] sm:$0xff] %v1754
        %2267 = vst [vmem:[%s135 + $0x288] sm:$0xff] %v1755
        %2268 = vst [vmem:[%s135 + $0x290] sm:$0xff] %v1756
        %2269 = vst [vmem:[%s135 + $0x298] sm:$0xff] %v1757
        %2270 = vst [vmem:[%s135 + $0x2a0] sm:$0xff] %v1758
        %2271 = vst [vmem:[%s135 + $0x2a8] sm:$0xff] %v1759
        %2272 = vst [vmem:[%s135 + $0x2b0] sm:$0xff] %v1760
        %2273 = vst [vmem:[%s135 + $0x2b8] sm:$0xff] %v1761
        %2274 = vst [vmem:[%s135 + $0x2c0] sm:$0xff] %v1762
        %2275 = vst [vmem:[%s135 + $0x2c8] sm:$0xff] %v1763
        %2276 = vst [vmem:[%s135 + $0x2d0] sm:$0xff] %v1764
        %2277 = vst [vmem:[%s135 + $0x2d8] sm:$0xff] %v1765
        %2278 = vst [vmem:[%s135 + $0x2e0] sm:$0xff] %v1766
        %2279 = vst [vmem:[%s135 + $0x2e8] sm:$0xff] %v1767
        %2280 = vst [vmem:[%s135 + $0x2f0] sm:$0xff] %v1768
        %2281 = vst [vmem:[%s135 + $0x2f8] sm:$0xff] %v1769
        %2282 = vst [vmem:[%s135 + $0x300] sm:$0xff] %v1770
        %2283 = vst [vmem:[%s135 + $0x308] sm:$0xff] %v1771
        %2284 = vst [vmem:[%s135 + $0x310] sm:$0xff] %v1772
        %2285 = vst [vmem:[%s135 + $0x318] sm:$0xff] %v1773
        %2286 = vst [vmem:[%s135 + $0x320] sm:$0xff] %v1774
        %2287 = vst [vmem:[%s135 + $0x328] sm:$0xff] %v1775
        %2288 = vst [vmem:[%s135 + $0x330] sm:$0xff] %v1776
        %2289 = vst [vmem:[%s135 + $0x338] sm:$0xff] %v1777
        %2290 = vst [vmem:[%s135 + $0x340] sm:$0xff] %v1778
        %2291 = vst [vmem:[%s135 + $0x348] sm:$0xff] %v1779
        %2292 = vst [vmem:[%s135 + $0x350] sm:$0xff] %v1780
        %2293 = vst [vmem:[%s135 + $0x358] sm:$0xff] %v1781
        %2294 = vst [vmem:[%s135 + $0x360] sm:$0xff] %v1782
        %2295 = vst [vmem:[%s135 + $0x368] sm:$0xff] %v1783
        %2296 = vst [vmem:[%s135 + $0x370] sm:$0xff] %v1784
        %2297 = vst [vmem:[%s135 + $0x378] sm:$0xff] %v1785
        %2298 = vst [vmem:[%s135 + $0x380] sm:$0xff] %v1786
        %2299 = vst [vmem:[%s135 + $0x388] sm:$0xff] %v1787
        %2300 = vst [vmem:[%s135 + $0x390] sm:$0xff] %v1788
        %2301 = vst [vmem:[%s135 + $0x398] sm:$0xff] %v1789
        %2302 = vst [vmem:[%s135 + $0x3a0] sm:$0xff] %v1790
        %2303 = vst [vmem:[%s135 + $0x3a8] sm:$0xff] %v1791
        %2304 = vst [vmem:[%s135 + $0x3b0] sm:$0xff] %v1792
        %2305 = vst [vmem:[%s135 + $0x3b8] sm:$0xff] %v1793
        %2306 = vst [vmem:[%s135 + $0x3c0] sm:$0xff] %v1794
        %2307 = vst [vmem:[%s135 + $0x3c8] sm:$0xff] %v1795
        %2308 = vst [vmem:[%s135 + $0x3d0] sm:$0xff] %v1796
        %2309 = vst [vmem:[%s135 + $0x3d8] sm:$0xff] %v1797
        %2310 = vst [vmem:[%s135 + $0x3e0] sm:$0xff] %v1798
        %2311 = vst [vmem:[%s135 + $0x3e8] sm:$0xff] %v1799
        %2312 = vst [vmem:[%s135 + $0x3f0] sm:$0xff] %v1800
        %2313 = vst [vmem:[%s135 + $0x3f8] sm:$0xff] %v1801
        %2314 = vst [vmem:[%s135 + $0x400] sm:$0xff] %v1802
        %2315 = vst [vmem:[%s135 + $0x408] sm:$0xff] %v1803
        %2316 = vst [vmem:[%s135 + $0x410] sm:$0xff] %v1804
        %2317 = vst [vmem:[%s135 + $0x418] sm:$0xff] %v1805
        %2318 = vst [vmem:[%s135 + $0x420] sm:$0xff] %v1806
        %2319 = vst [vmem:[%s135 + $0x428] sm:$0xff] %v1807
        %2320 = vst [vmem:[%s135 + $0x430] sm:$0xff] %v1808
        %2321 = vst [vmem:[%s135 + $0x438] sm:$0xff] %v1809
        %2322 = vst [vmem:[%s135 + $0x440] sm:$0xff] %v1810
        %2323 = vst [vmem:[%s135 + $0x448] sm:$0xff] %v1811
        %2324 = vst [vmem:[%s135 + $0x450] sm:$0xff] %v1812
        %2325 = vst [vmem:[%s135 + $0x458] sm:$0xff] %v1813
        %2326 = vst [vmem:[%s135 + $0x460] sm:$0xff] %v1814
        %2327 = vst [vmem:[%s135 + $0x468] sm:$0xff] %v1815
        %2328 = vst [vmem:[%s135 + $0x470] sm:$0xff] %v1816
        %2329 = vst [vmem:[%s135 + $0x478] sm:$0xff] %v1817
        %2330 = vst [vmem:[%s135 + $0x480] sm:$0xff] %v1818
        %2331 = vst [vmem:[%s135 + $0x488] sm:$0xff] %v1819
        %2332 = vst [vmem:[%s135 + $0x490] sm:$0xff] %v1820
        %2333 = vst [vmem:[%s135 + $0x498] sm:$0xff] %v1821
        %2334 = vst [vmem:[%s135 + $0x4a0] sm:$0xff] %v1822
        %2335 = vst [vmem:[%s135 + $0x4a8] sm:$0xff] %v1823
        %2336 = vst [vmem:[%s135 + $0x4b0] sm:$0xff] %v1824
        %2337 = vst [vmem:[%s135 + $0x4b8] sm:$0xff] %v1825
        %2338 = vst [vmem:[%s135 + $0x4c0] sm:$0xff] %v1826
        %2339 = vst [vmem:[%s135 + $0x4c8] sm:$0xff] %v1827
        %2340 = vst [vmem:[%s135 + $0x4d0] sm:$0xff] %v1828
        %2341 = vst [vmem:[%s135 + $0x4d8] sm:$0xff] %v1829
        %2342 = vst [vmem:[%s135 + $0x4e0] sm:$0xff] %v1830
        %2343 = vst [vmem:[%s135 + $0x4e8] sm:$0xff] %v1831
        %2344 = vst [vmem:[%s135 + $0x4f0] sm:$0xff] %v1832
        %2345 = vst [vmem:[%s135 + $0x4f8] sm:$0xff] %v1833
        %2346 = vst [vmem:[%s135 + $0x500] sm:$0xff] %v1834
        %2347 = vst [vmem:[%s135 + $0x508] sm:$0xff] %v1835
        %2348 = vst [vmem:[%s135 + $0x510] sm:$0xff] %v1836
        %2349 = vst [vmem:[%s135 + $0x518] sm:$0xff] %v1837
        %2350 = vst [vmem:[%s135 + $0x520] sm:$0xff] %v1838
        %2351 = vst [vmem:[%s135 + $0x528] sm:$0xff] %v1839
        %2352 = vst [vmem:[%s135 + $0x530] sm:$0xff] %v1840
        %2353 = vst [vmem:[%s135 + $0x538] sm:$0xff] %v1841
        %2354 = vst [vmem:[%s135 + $0x540] sm:$0xff] %v1842
        %2355 = vst [vmem:[%s135 + $0x548] sm:$0xff] %v1843
        %2356 = vst [vmem:[%s135 + $0x550] sm:$0xff] %v1844
        %2357 = vst [vmem:[%s135 + $0x558] sm:$0xff] %v1845
        %2358 = vst [vmem:[%s135 + $0x560] sm:$0xff] %v1846
        %2359 = vst [vmem:[%s135 + $0x568] sm:$0xff] %v1847
        %2360 = vst [vmem:[%s135 + $0x570] sm:$0xff] %v1848
        %2361 = vst [vmem:[%s135 + $0x578] sm:$0xff] %v1849
        %2362 = vst [vmem:[%s135 + $0x580] sm:$0xff] %v1850
        %2363 = vst [vmem:[%s135 + $0x588] sm:$0xff] %v1851
        %2364 = vst [vmem:[%s135 + $0x590] sm:$0xff] %v1852
        %2365 = vst [vmem:[%s135 + $0x598] sm:$0xff] %v1853
        %2366 = vst [vmem:[%s135 + $0x5a0] sm:$0xff] %v1854
        %2367 = vst [vmem:[%s135 + $0x5a8] sm:$0xff] %v1855
        %2368 = vst [vmem:[%s135 + $0x5b0] sm:$0xff] %v1856
        %2369 = vst [vmem:[%s135 + $0x5b8] sm:$0xff] %v1857
        %2370 = vst [vmem:[%s135 + $0x5c0] sm:$0xff] %v1858
        %2371 = vst [vmem:[%s135 + $0x5c8] sm:$0xff] %v1859
        %2372 = vst [vmem:[%s135 + $0x5d0] sm:$0xff] %v1860
        %2373 = vst [vmem:[%s135 + $0x5d8] sm:$0xff] %v1861
        %2374 = vst [vmem:[%s135 + $0x5e0] sm:$0xff] %v1862
        %2375 = vst [vmem:[%s135 + $0x5e8] sm:$0xff] %v1863
        %2376 = vst [vmem:[%s135 + $0x5f0] sm:$0xff] %v1864
        %2377 = vst [vmem:[%s135 + $0x5f8] sm:$0xff] %v1865
        %2378 = vst [vmem:[%s135 + $0x600] sm:$0xff] %v1866
        %2379 = vst [vmem:[%s135 + $0x608] sm:$0xff] %v1867
        %2380 = vst [vmem:[%s135 + $0x610] sm:$0xff] %v1868
        %2381 = vst [vmem:[%s135 + $0x618] sm:$0xff] %v1869
        %2382 = vst [vmem:[%s135 + $0x620] sm:$0xff] %v1870
        %2383 = vst [vmem:[%s135 + $0x628] sm:$0xff] %v1871
        %2384 = vst [vmem:[%s135 + $0x630] sm:$0xff] %v1872
        %2385 = vst [vmem:[%s135 + $0x638] sm:$0xff] %v1873
        %2386 = vst [vmem:[%s135 + $0x640] sm:$0xff] %v1874
        %2387 = vst [vmem:[%s135 + $0x648] sm:$0xff] %v1875
        %2388 = vst [vmem:[%s135 + $0x650] sm:$0xff] %v1876
        %2389 = vst [vmem:[%s135 + $0x658] sm:$0xff] %v1877
        %2390 = vst [vmem:[%s135 + $0x660] sm:$0xff] %v1878
        %2391 = vst [vmem:[%s135 + $0x668] sm:$0xff] %v1879
        %2392 = vst [vmem:[%s135 + $0x670] sm:$0xff] %v1880
        %2393 = vst [vmem:[%s135 + $0x678] sm:$0xff] %v1881
        %2394 = vst [vmem:[%s135 + $0x680] sm:$0xff] %v1882
        %2395 = vst [vmem:[%s135 + $0x688] sm:$0xff] %v1883
        %2396 = vst [vmem:[%s135 + $0x690] sm:$0xff] %v1884
        %2397 = vst [vmem:[%s135 + $0x698] sm:$0xff] %v1885
        %2398 = vst [vmem:[%s135 + $0x6a0] sm:$0xff] %v1886
        %2399 = vst [vmem:[%s135 + $0x6a8] sm:$0xff] %v1887
        %2400 = vst [vmem:[%s135 + $0x6b0] sm:$0xff] %v1888
        %2401 = vst [vmem:[%s135 + $0x6b8] sm:$0xff] %v1889
        %2402 = vst [vmem:[%s135 + $0x6c0] sm:$0xff] %v1890
        %2403 = vst [vmem:[%s135 + $0x6c8] sm:$0xff] %v1891
        %2404 = vst [vmem:[%s135 + $0x6d0] sm:$0xff] %v1892
        %2405 = vst [vmem:[%s135 + $0x6d8] sm:$0xff] %v1893
        %2406 = vst [vmem:[%s135 + $0x6e0] sm:$0xff] %v1894
        %2407 = vst [vmem:[%s135 + $0x6e8] sm:$0xff] %v1895
        %2408 = vst [vmem:[%s135 + $0x6f0] sm:$0xff] %v1896
        %2409 = vst [vmem:[%s135 + $0x6f8] sm:$0xff] %v1897
        %2410 = vst [vmem:[%s135 + $0x700] sm:$0xff] %v1898
        %2411 = vst [vmem:[%s135 + $0x708] sm:$0xff] %v1899
        %2412 = vst [vmem:[%s135 + $0x710] sm:$0xff] %v1900
        %2413 = vst [vmem:[%s135 + $0x718] sm:$0xff] %v1901
        %2414 = vst [vmem:[%s135 + $0x720] sm:$0xff] %v1902
        %2415 = vst [vmem:[%s135 + $0x728] sm:$0xff] %v1903
        %2416 = vst [vmem:[%s135 + $0x730] sm:$0xff] %v1904
        %2417 = vst [vmem:[%s135 + $0x738] sm:$0xff] %v1905
        %2418 = vst [vmem:[%s135 + $0x740] sm:$0xff] %v1906
        %2419 = vst [vmem:[%s135 + $0x748] sm:$0xff] %v1907
        %2420 = vst [vmem:[%s135 + $0x750] sm:$0xff] %v1908
        %2421 = vst [vmem:[%s135 + $0x758] sm:$0xff] %v1909
        %2422 = vst [vmem:[%s135 + $0x760] sm:$0xff] %v1910
        %2423 = vst [vmem:[%s135 + $0x768] sm:$0xff] %v1911
        %2424 = vst [vmem:[%s135 + $0x770] sm:$0xff] %v1912
        %2425 = vst [vmem:[%s135 + $0x778] sm:$0xff] %v1913
        %2426 = vst [vmem:[%s135 + $0x780] sm:$0xff] %v1914
        %2427 = vst [vmem:[%s135 + $0x788] sm:$0xff] %v1915
        %2428 = vst [vmem:[%s135 + $0x790] sm:$0xff] %v1916
        %2429 = vst [vmem:[%s135 + $0x798] sm:$0xff] %v1917
        %2430 = vst [vmem:[%s135 + $0x7a0] sm:$0xff] %v1918
        %2431 = vst [vmem:[%s135 + $0x7a8] sm:$0xff] %v1919
        %2432 = vst [vmem:[%s135 + $0x7b0] sm:$0xff] %v1920
        %2433 = vst [vmem:[%s135 + $0x7b8] sm:$0xff] %v1921
        %2434 = vst [vmem:[%s135 + $0x7c0] sm:$0xff] %v1922
        %2435 = vst [vmem:[%s135 + $0x7c8] sm:$0xff] %v1923
        %2436 = vst [vmem:[%s135 + $0x7d0] sm:$0xff] %v1924
        %2437 = vst [vmem:[%s135 + $0x7d8] sm:$0xff] %v1925
        %2438 = vst [vmem:[%s135 + $0x7e0] sm:$0xff] %v1926
        %2439 = vst [vmem:[%s135 + $0x7e8] sm:$0xff] %v1927
        %2440 = vst [vmem:[%s135 + $0x7f0] sm:$0xff] %v1928
        %2441 = vst [vmem:[%s135 + $0x7f8] sm:$0xff] %v1929
        %2442 = vst [vmem:[%s135 + $0x800] sm:$0xff] %v1930
        %2443 = vst [vmem:[%s135 + $0x808] sm:$0xff] %v1931
        %2444 = vst [vmem:[%s135 + $0x810] sm:$0xff] %v1932
        %2445 = vst [vmem:[%s135 + $0x818] sm:$0xff] %v1933
        %2446 = vst [vmem:[%s135 + $0x820] sm:$0xff] %v1934
        %2447 = vst [vmem:[%s135 + $0x828] sm:$0xff] %v1935
        %2448 = vst [vmem:[%s135 + $0x830] sm:$0xff] %v1936
        %2449 = vst [vmem:[%s135 + $0x838] sm:$0xff] %v1937
        %2450 = vst [vmem:[%s135 + $0x840] sm:$0xff] %v1938
        %2451 = vst [vmem:[%s135 + $0x848] sm:$0xff] %v1939
        %2452 = vst [vmem:[%s135 + $0x850] sm:$0xff] %v1940
        %2453 = vst [vmem:[%s135 + $0x858] sm:$0xff] %v1941
        %2454 = vst [vmem:[%s135 + $0x860] sm:$0xff] %v1942
        %2455 = vst [vmem:[%s135 + $0x868] sm:$0xff] %v1943
        %2456 = vst [vmem:[%s135 + $0x870] sm:$0xff] %v1944
        %2457 = vst [vmem:[%s135 + $0x878] sm:$0xff] %v1945
        %2458 = vst [vmem:[%s135 + $0x880] sm:$0xff] %v1946
        %2459 = vst [vmem:[%s135 + $0x888] sm:$0xff] %v1947
        %2460 = vst [vmem:[%s135 + $0x890] sm:$0xff] %v1948
        %2461 = vst [vmem:[%s135 + $0x898] sm:$0xff] %v1949
        %2462 = vst [vmem:[%s135 + $0x8a0] sm:$0xff] %v1950
        %2463 = vst [vmem:[%s135 + $0x8a8] sm:$0xff] %v1951
        %2464 = vst [vmem:[%s135 + $0x8b0] sm:$0xff] %v1952
        %2465 = vst [vmem:[%s135 + $0x8b8] sm:$0xff] %v1953
        %2466 = vst [vmem:[%s135 + $0x8c0] sm:$0xff] %v1954
        %2467 = vst [vmem:[%s135 + $0x8c8] sm:$0xff] %v1955
        %2468 = vst [vmem:[%s135 + $0x8d0] sm:$0xff] %v1956
        %2469 = vst [vmem:[%s135 + $0x8d8] sm:$0xff] %v1957
        %2470 = vst [vmem:[%s135 + $0x8e0] sm:$0xff] %v1958
        %2471 = vst [vmem:[%s135 + $0x8e8] sm:$0xff] %v1959
        %2472 = vst [vmem:[%s135 + $0x8f0] sm:$0xff] %v1960
        %2473 = vst [vmem:[%s135 + $0x8f8] sm:$0xff] %v1961
        %2474 = vst [vmem:[%s135 + $0x900] sm:$0xff] %v1962
        %2475 = vst [vmem:[%s135 + $0x908] sm:$0xff] %v1963
        %2476 = vst [vmem:[%s135 + $0x910] sm:$0xff] %v1964
        %2477 = vst [vmem:[%s135 + $0x918] sm:$0xff] %v1965
        %2478 = vst [vmem:[%s135 + $0x920] sm:$0xff] %v1966
        %2479 = vst [vmem:[%s135 + $0x928] sm:$0xff] %v1967
        %2480 = vst [vmem:[%s135 + $0x930] sm:$0xff] %v1968
        %2481 = vst [vmem:[%s135 + $0x938] sm:$0xff] %v1969
        %2482 = vst [vmem:[%s135 + $0x940] sm:$0xff] %v1970
        %2483 = vst [vmem:[%s135 + $0x948] sm:$0xff] %v1971
        %2484 = vst [vmem:[%s135 + $0x950] sm:$0xff] %v1972
        %2485 = vst [vmem:[%s135 + $0x958] sm:$0xff] %v1973
        %2486 = vst [vmem:[%s135 + $0x960] sm:$0xff] %v1974
        %2487 = vst [vmem:[%s135 + $0x968] sm:$0xff] %v1975
        %2488 = vst [vmem:[%s135 + $0x970] sm:$0xff] %v1976
        %2489 = vst [vmem:[%s135 + $0x978] sm:$0xff] %v1977
        %2490 = vst [vmem:[%s135 + $0x980] sm:$0xff] %v1978
        %2491 = vst [vmem:[%s135 + $0x988] sm:$0xff] %v1979
        %2492 = vst [vmem:[%s135 + $0x990] sm:$0xff] %v1980
        %2493 = vst [vmem:[%s135 + $0x998] sm:$0xff] %v1981
        %2494 = vst [vmem:[%s135 + $0x9a0] sm:$0xff] %v1982
        %2495 = vst [vmem:[%s135 + $0x9a8] sm:$0xff] %v1983
        %2496 = vst [vmem:[%s135 + $0x9b0] sm:$0xff] %v1984
        %2497 = vst [vmem:[%s135 + $0x9b8] sm:$0xff] %v1985
        %2498 = vst [vmem:[%s135 + $0x9c0] sm:$0xff] %v1986
        %2499 = vst [vmem:[%s135 + $0x9c8] sm:$0xff] %v1987
        %2500 = vst [vmem:[%s135 + $0x9d0] sm:$0xff] %v1988
        %2501 = vst [vmem:[%s135 + $0x9d8] sm:$0xff] %v1989
        %2502 = vst [vmem:[%s135 + $0x9e0] sm:$0xff] %v1990
        %2503 = vst [vmem:[%s135 + $0x9e8] sm:$0xff] %v1991
        %2504 = vst [vmem:[%s135 + $0x9f0] sm:$0xff] %v1992
        %2505 = vst [vmem:[%s135 + $0x9f8] sm:$0xff] %v1993
        %2506 = vst [vmem:[%s135 + $0xa00] sm:$0xff] %v1994
        %2507 = vst [vmem:[%s135 + $0xa08] sm:$0xff] %v1995
        %2508 = vst [vmem:[%s135 + $0xa10] sm:$0xff] %v1996
        %2509 = vst [vmem:[%s135 + $0xa18] sm:$0xff] %v1997
        %2510 = vst [vmem:[%s135 + $0xa20] sm:$0xff] %v1998
        %2511 = vst [vmem:[%s135 + $0xa28] sm:$0xff] %v1999
        %2512 = vst [vmem:[%s135 + $0xa30] sm:$0xff] %v2000
        %2513 = vst [vmem:[%s135 + $0xa38] sm:$0xff] %v2001
        %2514 = vst [vmem:[%s135 + $0xa40] sm:$0xff] %v2002
        %2515 = vst [vmem:[%s135 + $0xa48] sm:$0xff] %v2003
        %2516 = vst [vmem:[%s135 + $0xa50] sm:$0xff] %v2004
        %2517 = vst [vmem:[%s135 + $0xa58] sm:$0xff] %v2005
        %2518 = vst [vmem:[%s135 + $0xa60] sm:$0xff] %v2006
        %2519 = vst [vmem:[%s135 + $0xa68] sm:$0xff] %v2007
        %2520 = vst [vmem:[%s135 + $0xa70] sm:$0xff] %v2008
        %2521 = vst [vmem:[%s135 + $0xa78] sm:$0xff] %v2009
        %2522 = vst [vmem:[%s135 + $0xa80] sm:$0xff] %v2010
        %2523 = vst [vmem:[%s135 + $0xa88] sm:$0xff] %v2011
        %2524 = vst [vmem:[%s135 + $0xa90] sm:$0xff] %v2012
        %2525 = vst [vmem:[%s135 + $0xa98] sm:$0xff] %v2013
        %2526 = vst [vmem:[%s135 + $0xaa0] sm:$0xff] %v2014
        %2527 = vst [vmem:[%s135 + $0xaa8] sm:$0xff] %v2015
        %2528 = vst [vmem:[%s135 + $0xab0] sm:$0xff] %v2016
        %2529 = vst [vmem:[%s135 + $0xab8] sm:$0xff] %v2017
        %2530 = vst [vmem:[%s135 + $0xac0] sm:$0xff] %v2018
        %2531 = vst [vmem:[%s135 + $0xac8] sm:$0xff] %v2019
        %2532 = vst [vmem:[%s135 + $0xad0] sm:$0xff] %v2020
        %2533 = vst [vmem:[%s135 + $0xad8] sm:$0xff] %v2021
        %2534 = vst [vmem:[%s135 + $0xae0] sm:$0xff] %v2022
        %2535 = vst [vmem:[%s135 + $0xae8] sm:$0xff] %v2023
        %2536 = vst [vmem:[%s135 + $0xaf0] sm:$0xff] %v2024
        %2537 = vst [vmem:[%s135 + $0xaf8] sm:$0xff] %v2025
        %2538 = vst [vmem:[%s135 + $0xb00] sm:$0xff] %v2026
        %2539 = vst [vmem:[%s135 + $0xb08] sm:$0xff] %v2027
        %2540 = vst [vmem:[%s135 + $0xb10] sm:$0xff] %v2028
        %2541 = vst [vmem:[%s135 + $0xb18] sm:$0xff] %v2029
        %2542 = vst [vmem:[%s135 + $0xb20] sm:$0xff] %v2030
        %2543 = vst [vmem:[%s135 + $0xb28] sm:$0xff] %v2031
        %2544 = vst [vmem:[%s135 + $0xb30] sm:$0xff] %v2032
        %2545 = vst [vmem:[%s135 + $0xb38] sm:$0xff] %v2033
        %2546 = vst [vmem:[%s135 + $0xb40] sm:$0xff] %v2034
        %2547 = vst [vmem:[%s135 + $0xb48] sm:$0xff] %v2035
        %2548 = vst [vmem:[%s135 + $0xb50] sm:$0xff] %v2036
        %2549 = vst [vmem:[%s135 + $0xb58] sm:$0xff] %v2037
        %2550 = vst [vmem:[%s135 + $0xb60] sm:$0xff] %v2038
        %2551 = vst [vmem:[%s135 + $0xb68] sm:$0xff] %v2039
        %2552 = vst [vmem:[%s135 + $0xb70] sm:$0xff] %v2040
        %2553 = vst [vmem:[%s135 + $0xb78] sm:$0xff] %v2041
        %2554 = vst [vmem:[%s135 + $0xb80] sm:$0xff] %v2042
        %2555 = vst [vmem:[%s135 + $0xb88] sm:$0xff] %v2043
        %2556 = vst [vmem:[%s135 + $0xb90] sm:$0xff] %v2044
        %2557 = vst [vmem:[%s135 + $0xb98] sm:$0xff] %v2045
        %2558 = vst [vmem:[%s135 + $0xba0] sm:$0xff] %v2046
        %2559 = vst [vmem:[%s135 + $0xba8] sm:$0xff] %v2047
        %2560 = vst [vmem:[%s135 + $0xbb0] sm:$0xff] %v2048
        %2561 = vst [vmem:[%s135 + $0xbb8] sm:$0xff] %v2049
        %2562 = vst [vmem:[%s135 + $0xbc0] sm:$0xff] %v2050
        %2563 = vst [vmem:[%s135 + $0xbc8] sm:$0xff] %v2051
        %2564 = vst [vmem:[%s135 + $0xbd0] sm:$0xff] %v2052
        %2565 = vst [vmem:[%s135 + $0xbd8] sm:$0xff] %v2053
        %2566 = vst [vmem:[%s135 + $0xbe0] sm:$0xff] %v2054
        %2567 = vst [vmem:[%s135 + $0xbe8] sm:$0xff] %v2055
        %2568 = vst [vmem:[%s135 + $0xbf0] sm:$0xff] %v2056
        %2569 = vst [vmem:[%s135 + $0xbf8] sm:$0xff] %v2057
        %2570 = vst [vmem:[%s135 + $0xc00] sm:$0xff] %v2058
        %2571 = vst [vmem:[%s135 + $0xc08] sm:$0xff] %v2059
        %2572 = vst [vmem:[%s135 + $0xc10] sm:$0xff] %v2060
        %2573 = vst [vmem:[%s135 + $0xc18] sm:$0xff] %v2061
        %2574 = vst [vmem:[%s135 + $0xc20] sm:$0xff] %v2062
        %2575 = vst [vmem:[%s135 + $0xc28] sm:$0xff] %v2063
        %2576 = vst [vmem:[%s135 + $0xc30] sm:$0xff] %v2064
        %2577 = vst [vmem:[%s135 + $0xc38] sm:$0xff] %v2065
        %2578 = vst [vmem:[%s135 + $0xc40] sm:$0xff] %v2066
        %2579 = vst [vmem:[%s135 + $0xc48] sm:$0xff] %v2067
        %2580 = vst [vmem:[%s135 + $0xc50] sm:$0xff] %v2068
        %2581 = vst [vmem:[%s135 + $0xc58] sm:$0xff] %v2069
        %2582 = vst [vmem:[%s135 + $0xc60] sm:$0xff] %v2070
        %2583 = vst [vmem:[%s135 + $0xc68] sm:$0xff] %v2071
        %2584 = vst [vmem:[%s135 + $0xc70] sm:$0xff] %v2072
        %2585 = vst [vmem:[%s135 + $0xc78] sm:$0xff] %v2073
        %2586 = vst [vmem:[%s135 + $0xc80] sm:$0xff] %v2074
        %2587 = vst [vmem:[%s135 + $0xc88] sm:$0xff] %v2075
        %2588 = vst [vmem:[%s135 + $0xc90] sm:$0xff] %v2076
        %2589 = vst [vmem:[%s135 + $0xc98] sm:$0xff] %v2077
        %2590 = vst [vmem:[%s135 + $0xca0] sm:$0xff] %v2078
        %2591 = vst [vmem:[%s135 + $0xca8] sm:$0xff] %v2079
        %2592 = vst [vmem:[%s135 + $0xcb0] sm:$0xff] %v2080
        %2593 = vst [vmem:[%s135 + $0xcb8] sm:$0xff] %v2081
        %2594 = vst [vmem:[%s135 + $0xcc0] sm:$0xff] %v2082
        %2595 = vst [vmem:[%s135 + $0xcc8] sm:$0xff] %v2083
        %2596 = vst [vmem:[%s135 + $0xcd0] sm:$0xff] %v2084
        %2597 = vst [vmem:[%s135 + $0xcd8] sm:$0xff] %v2085
        %2598 = vst [vmem:[%s135 + $0xce0] sm:$0xff] %v2086
        %2599 = vst [vmem:[%s135 + $0xce8] sm:$0xff] %v2087
        %2600 = vst [vmem:[%s135 + $0xcf0] sm:$0xff] %v2088
        %2601 = vst [vmem:[%s135 + $0xcf8] sm:$0xff] %v2089
        %2602 = vst [vmem:[%s135 + $0xd00] sm:$0xff] %v2090
        %2603 = vst [vmem:[%s135 + $0xd08] sm:$0xff] %v2091
        %2604 = vst [vmem:[%s135 + $0xd10] sm:$0xff] %v2092
        %2605 = vst [vmem:[%s135 + $0xd18] sm:$0xff] %v2093
        %2606 = vst [vmem:[%s135 + $0xd20] sm:$0xff] %v2094
        %2607 = vst [vmem:[%s135 + $0xd28] sm:$0xff] %v2095
        %2608 = vst [vmem:[%s135 + $0xd30] sm:$0xff] %v2096
        %2609 = vst [vmem:[%s135 + $0xd38] sm:$0xff] %v2097
        %2610 = vst [vmem:[%s135 + $0xd40] sm:$0xff] %v2098
        %2611 = vst [vmem:[%s135 + $0xd48] sm:$0xff] %v2099
        %2612 = vst [vmem:[%s135 + $0xd50] sm:$0xff] %v2100
        %2613 = vst [vmem:[%s135 + $0xd58] sm:$0xff] %v2101
        %2614 = vst [vmem:[%s135 + $0xd60] sm:$0xff] %v2102
        %2615 = vst [vmem:[%s135 + $0xd68] sm:$0xff] %v2103
        %2616 = vst [vmem:[%s135 + $0xd70] sm:$0xff] %v2104
        %2617 = vst [vmem:[%s135 + $0xd78] sm:$0xff] %v2105
        %2618 = vst [vmem:[%s135 + $0xd80] sm:$0xff] %v2106
        %2619 = vst [vmem:[%s135 + $0xd88] sm:$0xff] %v2107
        %2620 = vst [vmem:[%s135 + $0xd90] sm:$0xff] %v2108
        %2621 = vst [vmem:[%s135 + $0xd98] sm:$0xff] %v2109
        %2622 = vst [vmem:[%s135 + $0xda0] sm:$0xff] %v2110
        %2623 = vst [vmem:[%s135 + $0xda8] sm:$0xff] %v2111
        %2624 = vst [vmem:[%s135 + $0xdb0] sm:$0xff] %v2112
        %2625 = vst [vmem:[%s135 + $0xdb8] sm:$0xff] %v2113
        %2626 = vst [vmem:[%s135 + $0xdc0] sm:$0xff] %v2114
        %2627 = vst [vmem:[%s135 + $0xdc8] sm:$0xff] %v2115
        %2628 = vst [vmem:[%s135 + $0xdd0] sm:$0xff] %v2116
        %2629 = vst [vmem:[%s135 + $0xdd8] sm:$0xff] %v2117
        %2630 = vst [vmem:[%s135 + $0xde0] sm:$0xff] %v2118
        %2631 = vst [vmem:[%s135 + $0xde8] sm:$0xff] %v2119
        %2632 = vst [vmem:[%s135 + $0xdf0] sm:$0xff] %v2120
        %2633 = vst [vmem:[%s135 + $0xdf8] sm:$0xff] %v2121
        %2634 = vst [vmem:[%s135 + $0xe00] sm:$0xff] %v2122
        %2635 = vst [vmem:[%s135 + $0xe08] sm:$0xff] %v2123
        %2636 = vst [vmem:[%s135 + $0xe10] sm:$0xff] %v2124
        %2637 = vst [vmem:[%s135 + $0xe18] sm:$0xff] %v2125
        %2638 = vst [vmem:[%s135 + $0xe20] sm:$0xff] %v2126
        %2639 = vst [vmem:[%s135 + $0xe28] sm:$0xff] %v2127
        %2640 = vst [vmem:[%s135 + $0xe30] sm:$0xff] %v2128
        %2641 = vst [vmem:[%s135 + $0xe38] sm:$0xff] %v2129
        %2642 = vst [vmem:[%s135 + $0xe40] sm:$0xff] %v2130
        %2643 = vst [vmem:[%s135 + $0xe48] sm:$0xff] %v2131
        %2644 = vst [vmem:[%s135 + $0xe50] sm:$0xff] %v2132
        %2645 = vst [vmem:[%s135 + $0xe58] sm:$0xff] %v2133
        %2646 = vst [vmem:[%s135 + $0xe60] sm:$0xff] %v2134
        %2647 = vst [vmem:[%s135 + $0xe68] sm:$0xff] %v2135
        %2648 = vst [vmem:[%s135 + $0xe70] sm:$0xff] %v2136
        %2649 = vst [vmem:[%s135 + $0xe78] sm:$0xff] %v2137
        %2650 = vst [vmem:[%s135 + $0xe80] sm:$0xff] %v2138
        %2651 = vst [vmem:[%s135 + $0xe88] sm:$0xff] %v2139
        %2652 = vst [vmem:[%s135 + $0xe90] sm:$0xff] %v2140
        %2653 = vst [vmem:[%s135 + $0xe98] sm:$0xff] %v2141
        %2654 = vst [vmem:[%s135 + $0xea0] sm:$0xff] %v2142
        %2655 = vst [vmem:[%s135 + $0xea8] sm:$0xff] %v2143
        %2656 = vst [vmem:[%s135 + $0xeb0] sm:$0xff] %v2144
        %2657 = vst [vmem:[%s135 + $0xeb8] sm:$0xff] %v2145
        %2658 = vst [vmem:[%s135 + $0xec0] sm:$0xff] %v2146
        %2659 = vst [vmem:[%s135 + $0xec8] sm:$0xff] %v2147
        %2660 = vst [vmem:[%s135 + $0xed0] sm:$0xff] %v2148
        %2661 = vst [vmem:[%s135 + $0xed8] sm:$0xff] %v2149
        %2662 = vst [vmem:[%s135 + $0xee0] sm:$0xff] %v2150
        %2663 = vst [vmem:[%s135 + $0xee8] sm:$0xff] %v2151
        %2664 = vst [vmem:[%s135 + $0xef0] sm:$0xff] %v2152
        %2665 = vst [vmem:[%s135 + $0xef8] sm:$0xff] %v2153
        %2666 = vst [vmem:[%s135 + $0xf00] sm:$0xff] %v2154
        %2667 = vst [vmem:[%s135 + $0xf08] sm:$0xff] %v2155
        %2668 = vst [vmem:[%s135 + $0xf10] sm:$0xff] %v2156
        %2669 = vst [vmem:[%s135 + $0xf18] sm:$0xff] %v2157
        %2670 = vst [vmem:[%s135 + $0xf20] sm:$0xff] %v2158
        %2671 = vst [vmem:[%s135 + $0xf28] sm:$0xff] %v2159
        %2672 = vst [vmem:[%s135 + $0xf30] sm:$0xff] %v2160
        %2673 = vst [vmem:[%s135 + $0xf38] sm:$0xff] %v2161
        %2674 = vst [vmem:[%s135 + $0xf40] sm:$0xff] %v2162
        %2675 = vst [vmem:[%s135 + $0xf48] sm:$0xff] %v2163
        %2676 = vst [vmem:[%s135 + $0xf50] sm:$0xff] %v2164
        %2677 = vst [vmem:[%s135 + $0xf58] sm:$0xff] %v2165
        %2678 = vst [vmem:[%s135 + $0xf60] sm:$0xff] %v2166
        %2679 = vst [vmem:[%s135 + $0xf68] sm:$0xff] %v2167
        %2680 = vst [vmem:[%s135 + $0xf70] sm:$0xff] %v2168
        %2681 = vst [vmem:[%s135 + $0xf78] sm:$0xff] %v2169
        %2682 = vst [vmem:[%s135 + $0xf80] sm:$0xff] %v2170
        %2683 = vst [vmem:[%s135 + $0xf88] sm:$0xff] %v2171
        %2684 = vst [vmem:[%s135 + $0xf90] sm:$0xff] %v2172
        %2685 = vst [vmem:[%s135 + $0xf98] sm:$0xff] %v2173
        %2686 = vst [vmem:[%s135 + $0xfa0] sm:$0xff] %v2174
        %2687 = vst [vmem:[%s135 + $0xfa8] sm:$0xff] %v2175
        %2688 = vst [vmem:[%s135 + $0xfb0] sm:$0xff] %v2176
        %2689 = vst [vmem:[%s135 + $0xfb8] sm:$0xff] %v2177
        %2690 = vst [vmem:[%s135 + $0xfc0] sm:$0xff] %v2178
        %2691 = vst [vmem:[%s135 + $0xfc8] sm:$0xff] %v2179
        %2692 = vst [vmem:[%s135 + $0xfd0] sm:$0xff] %v2180
        %2693 = vst [vmem:[%s135 + $0xfd8] sm:$0xff] %v2181
        %2694 = vst [vmem:[%s135 + $0xfe0] sm:$0xff] %v2182
        %2695 = vst [vmem:[%s135 + $0xfe8] sm:$0xff] %v2183
        %2696 = vst [vmem:[%s135 + $0xff0] sm:$0xff] %v2184
        %2697 = vst [vmem:[%s135 + $0xff8] sm:$0xff] %v2185
        %s2698 = sand.u32 %s52, 1
        %s2699 = scalar_lea.sflag [#allocation4], %s2698
        %s2700 = sand.u32 %s52, 1
        %s2701 = smul.addr %s2700, 4096
        %s2702 = scalar_lea.vmem [#allocation5], %s2701
        // Predicated region
        $region29: #{tpu_custom_call.1} parent=23 // pred_check
          %p2703 = pneg %p62
        $region30: #{tpu_custom_call.1} parent=23 // pred_check_branch
          %2705 = sbr.rel (%p2703) target = $region32
        $region31: #{tpu_custom_call.1} parent=23 // pred_region
          %s2706 = smul.u32 16, %s18
          %s2708 = ssub.s32 65536, 65536
          %2709 = vsyncadd %s2699, %s2708
          %s2710 = smul.addr %s2706, 32
          %s2711 = smul.addr %s2710, 128
          %s2712 = scalar_lea.hbm %s1, %s2711
          %s2713 = sshll.u32 %s2702, 4
          %s2714 = int_to_ptr.vmem [resolvable:$true] %s2713
          %2719 = dma.vmem_to_hbm [thread:$0]  %s2714, 65536, %s2712, %s2699, 4096, 4096, 256
        $region32: #{tpu_custom_call.1} parent=23 // pred_fallthru
          _
      $region24: #{tpu_custom_call.1} parent=5 // pred_fallthru
        _
      %p2720 = scmp.le.s32.totalorder 2, %s13
      // Predicated region
      $region33: #{tpu_custom_call.1} parent=5 // pred_check
        %p2721 = pneg %p2720
      $region34: #{tpu_custom_call.1} parent=5 // pred_check_branch
        %2723 = sbr.rel (%p2721) target = $region36
      $region35: #{tpu_custom_call.1} parent=5 // pred_region
        %s2724 = ssub.s32 %s13, 2
        // Predicated region
        $region37: #{tpu_custom_call.1} parent=35 // pred_check
          %p2725 = pneg %p68
        $region38: #{tpu_custom_call.1} parent=35 // pred_check_branch
          %2727 = sbr.rel (%p2725) target = $region40
        $region39: #{tpu_custom_call.1} parent=35 // pred_region
          %s2728 = sand.u32 %s53, 1
          %s2729 = scalar_lea.sflag [#allocation4], %s2728
          %s2730 = sand.u32 %s53, 1
          %s2731 = smul.addr %s2730, 4096
          %s2732 = scalar_lea.vmem [#allocation5], %s2731
          %2733 = dma.done %s2729, 65536
        $region40: #{tpu_custom_call.1} parent=35 // pred_fallthru
          _
      $region36: #{tpu_custom_call.1} parent=5 // pred_fallthru
        _
    $region6: #{tpu_custom_call.1} parent=1 // loop_footer
      %s17 = sadd.s32 1, %s13
    $region7: #{tpu_custom_call.1} parent=1 // loop_footer_branch
      %12 = sbr.rel target = $region3
    $region8: #{tpu_custom_call.1} parent=1 // loop_exit
      _
    %2734 = vsyncpa [#allocation3], 1
    %s2735 = scalar_lea.sflag [#allocation3], 1
    %2736 = vsyncpa %s2735, 1
    %2737 = vsyncpa [#allocation4], 1
    %s2738 = scalar_lea.sflag [#allocation4], 1
    %2739 = vsyncpa %s2738, 1

</llo_original>
